<compile_context>
chip_gen: v7x
topology: tpu7x:2x2x1
jax: 0.10.0
libtpu: 0.0.40
codegen_flags: <defaults>
</compile_context>

<pallas_src>
import jax
import jax.numpy as jnp
from jax.experimental import pallas as pl
from jax.experimental.pallas import tpu as pltpu

LATENT_DIMS = 4
HIDDEN = 512
OUT_FEATURES = 784          # 28 * 28
OUT_PADDED = 896            # 7 * 128  -> lane-dense output stores


def _round_up(x, m):
    return (x + m - 1) // m * m


def decoder_kernel(z_ref, w1_ref, b1_ref, w2_ref, b2_ref, out_ref):
    """One batch tile: relu(z @ W1 + b1) @ W2 + b2 -> sigmoid."""
    # ----- layer 1: (TM,4) x (4,512) contraction on the VPU -----------------
    # K=4 would waste the MXU systolic depth; four broadcast-FMAs on the VPU
    # overlap with the layer-2 vmatmul stream instead.
    z = z_ref[...]                        # (TM, 4)   f32
    w1 = w1_ref[...]                      # (4, 512)  f32
    h = (b1_ref[...]                      # (1, 512)  broadcasts over TM
         + z[:, 0:1] * w1[0:1, :]
         + z[:, 1:2] * w1[1:2, :]
         + z[:, 2:3] * w1[2:3, :]
         + z[:, 3:4] * w1[3:4, :])        # (TM, 512)
    h = jnp.maximum(h, 0.0)

    # ----- layer 2: MXU matmul, bf16 operands, f32 accumulation -------------
    y = jnp.dot(h.astype(jnp.bfloat16), w2_ref[...],
                preferred_element_type=jnp.float32)        # (TM, 896)
    y = y + b2_ref[...]

    # sigmoid via EUP: exp + approximate reciprocal (VALU stays free).
    out_ref[...] = pl.reciprocal(1.0 + jnp.exp(-y), approx=True)


def decoder_forward(z, w1, b1, w2, b2, *, tm=256):
    """z:(B,4) f32; w1:(4,512) b1:(512,) w2:(512,784) b2:(784,) f32
       -> (B, 1, 28, 28) f32."""
    B = z.shape[0]
    tm = _round_up(min(tm, _round_up(B, 8)), 8)
    b_pad = _round_up(B, tm)
    if b_pad != B:
        z = jnp.pad(z, ((0, b_pad - B), (0, 0)))

    # Kernel-layout params (glue, not compute): lane-pad 784 -> 896 so output
    # stores are unmasked; bf16 weights halve the dominant HBM weight traffic.
    b1_k = b1.reshape(1, HIDDEN).astype(jnp.float32)
    w2_k = jnp.pad(w2, ((0, 0), (0, OUT_PADDED - OUT_FEATURES))).astype(jnp.bfloat16)
    b2_k = jnp.pad(b2.reshape(1, OUT_FEATURES),
                   ((0, 0), (0, OUT_PADDED - OUT_FEATURES))).astype(jnp.float32)

    cost = pl.CostEstimate(
        flops=2 * b_pad * (LATENT_DIMS * HIDDEN + HIDDEN * OUT_PADDED),
        transcendentals=2 * b_pad * OUT_PADDED,            # exp + reciprocal
        bytes_accessed=(w1.size * 4 + b1_k.size * 4
                        + w2_k.size * 2 + b2_k.size * 4
                        + b_pad * LATENT_DIMS * 4
                        + b_pad * OUT_PADDED * 4),
    )

    y = pl.pallas_call(
        decoder_kernel,
        out_shape=jax.ShapeDtypeStruct((b_pad, OUT_PADDED), jnp.float32),
        grid=(b_pad // tm,),
        in_specs=[
            pl.BlockSpec((tm, LATENT_DIMS), lambda i: (i, 0)),       # z: batch-tiled
            pl.BlockSpec((LATENT_DIMS, HIDDEN), lambda i: (0, 0)),   # W1: resident
            pl.BlockSpec((1, HIDDEN), lambda i: (0, 0)),             # b1: resident
            pl.BlockSpec((HIDDEN, OUT_PADDED), lambda i: (0, 0)),    # W2: resident
            pl.BlockSpec((1, OUT_PADDED), lambda i: (0, 0)),         # b2: resident
        ],
        out_specs=pl.BlockSpec((tm, OUT_PADDED), lambda i: (i, 0)),
        compiler_params=pltpu.CompilerParams(
            dimension_semantics=("parallel",)),
        cost_estimate=cost,
    )(z, w1.astype(jnp.float32), b1_k, w2_k, b2_k)

    return y[:B, :OUT_FEATURES].reshape(B, 1, 28, 28)


def init_params(key):
    """Deterministic params (torch Linear shapes, stored transposed: (in, out))."""
    k1, k2, k3, k4 = jax.random.split(key, 4)
    w1 = jax.random.normal(k1, (LATENT_DIMS, HIDDEN), jnp.float32) * 0.1
    b1 = jax.random.normal(k2, (HIDDEN,), jnp.float32) * 0.01
    w2 = jax.random.normal(k3, (HIDDEN, OUT_FEATURES), jnp.float32) * 0.05
    b2 = jax.random.normal(k4, (OUT_FEATURES,), jnp.float32) * 0.01
    return w1, b1, w2, b2


def reference_forward(z, w1, b1, w2, b2):
    """Pure-JAX f32 reference matching the PyTorch module semantics."""
    h = jnp.maximum(z @ w1 + b1, 0.0)
    y = jax.nn.sigmoid(h @ w2 + b2)
    return y.reshape(-1, 1, 28, 28)


if __name__ == "__main__":
    key = jax.random.PRNGKey(0)
    kz, kp = jax.random.split(key)

    B = 16
    z = jax.random.normal(kz, (B, LATENT_DIMS), jnp.float32)
    w1, b1, w2, b2 = init_params(kp)

    # tm=8 exercises the multi-tile batch grid with resident weights.
    out = decoder_forward(z, w1, b1, w2, b2, tm=8)
    out = jax.block_until_ready(out)

    ref = reference_forward(z, w1, b1, w2, b2)
    assert out.shape == (B, 1, 28, 28), out.shape
    # bf16 layer-2 operands + approx-reciprocal sigmoid: compare at 5e-3 abs.
    assert jnp.allclose(out, ref, atol=5e-3, rtol=0.0), (
        float(jnp.max(jnp.abs(out - ref))))

    print("KERNEL_OK")
</pallas_src>

<mosaic_0001>
module attributes {stable_mosaic.version = 11 : i64} {
  func.func @decoder_kernel(%arg0: i32, %arg1: memref<8x4xf32, #tpu.memory_space<vmem>>, %arg2: memref<4x512xf32, #tpu.memory_space<vmem>>, %arg3: memref<1x512xf32, #tpu.memory_space<vmem>>, %arg4: memref<512x896xbf16, #tpu.memory_space<vmem>>, %arg5: memref<1x896xf32, #tpu.memory_space<vmem>>, %arg6: memref<8x896xf32, #tpu.memory_space<vmem>>) attributes {dimension_semantics = [#tpu.dimension_semantics<parallel>], iteration_bounds = array<i64: 2>, scalar_prefetch = 0 : i64, scratch_operands = 0 : i64, tpu.core_type = #tpu.core_type<tc>, window_params = [{transform_indices = @transform_0, window_bounds = array<i64: 8, 4>}, {pipeline_mode = #tpu.pipeline_mode<synchronous>, transform_indices = @transform_1, window_bounds = array<i64: 4, 512>}, {pipeline_mode = #tpu.pipeline_mode<synchronous>, transform_indices = @transform_2, window_bounds = array<i64: 1, 512>}, {pipeline_mode = #tpu.pipeline_mode<synchronous>, transform_indices = @transform_3, window_bounds = array<i64: 512, 896>}, {pipeline_mode = #tpu.pipeline_mode<synchronous>, transform_indices = @transform_4, window_bounds = array<i64: 1, 896>}, {transform_indices = @transform_5, window_bounds = array<i64: 8, 896>}]} {
    %c0 = arith.constant 0 : index
    %c0_0 = arith.constant 0 : index
    %0 = vector.load %arg1[%c0, %c0_0] : memref<8x4xf32, #tpu.memory_space<vmem>>, vector<8x4xf32>
    %c0_1 = arith.constant 0 : index
    %c0_2 = arith.constant 0 : index
    %1 = vector.load %arg2[%c0_1, %c0_2] : memref<4x512xf32, #tpu.memory_space<vmem>>, vector<4x512xf32>
    %c0_3 = arith.constant 0 : index
    %c0_4 = arith.constant 0 : index
    %2 = vector.load %arg3[%c0_3, %c0_4] : memref<1x512xf32, #tpu.memory_space<vmem>>, vector<1x512xf32>
    %3 = vector.extract_strided_slice %0 {offsets = [0, 0], sizes = [8, 1], strides = [1, 1]} : vector<8x4xf32> to vector<8x1xf32>
    %4 = vector.extract_strided_slice %1 {offsets = [0, 0], sizes = [1, 512], strides = [1, 1]} : vector<4x512xf32> to vector<1x512xf32>
    %5 = vector.broadcast %3 : vector<8x1xf32> to vector<8x512xf32>
    %6 = vector.broadcast %4 : vector<1x512xf32> to vector<8x512xf32>
    %7 = arith.mulf %5, %6 : vector<8x512xf32>
    %8 = vector.broadcast %2 : vector<1x512xf32> to vector<8x512xf32>
    %9 = arith.addf %8, %7 : vector<8x512xf32>
    %10 = vector.extract_strided_slice %0 {offsets = [0, 1], sizes = [8, 1], strides = [1, 1]} : vector<8x4xf32> to vector<8x1xf32>
    %11 = vector.extract_strided_slice %1 {offsets = [1, 0], sizes = [1, 512], strides = [1, 1]} : vector<4x512xf32> to vector<1x512xf32>
    %12 = vector.broadcast %10 : vector<8x1xf32> to vector<8x512xf32>
    %13 = vector.broadcast %11 : vector<1x512xf32> to vector<8x512xf32>
    %14 = arith.mulf %12, %13 : vector<8x512xf32>
    %15 = arith.addf %9, %14 : vector<8x512xf32>
    %16 = vector.extract_strided_slice %0 {offsets = [0, 2], sizes = [8, 1], strides = [1, 1]} : vector<8x4xf32> to vector<8x1xf32>
    %17 = vector.extract_strided_slice %1 {offsets = [2, 0], sizes = [1, 512], strides = [1, 1]} : vector<4x512xf32> to vector<1x512xf32>
    %18 = vector.broadcast %16 : vector<8x1xf32> to vector<8x512xf32>
    %19 = vector.broadcast %17 : vector<1x512xf32> to vector<8x512xf32>
    %20 = arith.mulf %18, %19 : vector<8x512xf32>
    %21 = arith.addf %15, %20 : vector<8x512xf32>
    %22 = vector.extract_strided_slice %0 {offsets = [0, 3], sizes = [8, 1], strides = [1, 1]} : vector<8x4xf32> to vector<8x1xf32>
    %23 = vector.extract_strided_slice %1 {offsets = [3, 0], sizes = [1, 512], strides = [1, 1]} : vector<4x512xf32> to vector<1x512xf32>
    %24 = vector.broadcast %22 : vector<8x1xf32> to vector<8x512xf32>
    %25 = vector.broadcast %23 : vector<1x512xf32> to vector<8x512xf32>
    %26 = arith.mulf %24, %25 : vector<8x512xf32>
    %27 = arith.addf %21, %26 : vector<8x512xf32>
    %cst = arith.constant 0.000000e+00 : f32
    %28 = vector.broadcast %cst : f32 to vector<8x512xf32>
    %29 = arith.maximumf %27, %28 : vector<8x512xf32>
    %30 = arith.truncf %29 : vector<8x512xf32> to vector<8x512xbf16>
    %c0_5 = arith.constant 0 : index
    %c0_6 = arith.constant 0 : index
    %31 = vector.load %arg4[%c0_5, %c0_6] : memref<512x896xbf16, #tpu.memory_space<vmem>>, vector<512x896xbf16>
    %cst_7 = arith.constant dense<0.000000e+00> : vector<8x896xf32>
    %32 = tpu.matmul %30, %31, %cst_7 {dimension_numbers = #tpu.dot_dimension_numbers<[1], [0], [0], [1], [0, 0, 1, 1], [], []>} : vector<8x512xbf16>, vector<512x896xbf16>, vector<8x896xf32> -> vector<8x896xf32>
    %c0_8 = arith.constant 0 : index
    %c0_9 = arith.constant 0 : index
    %33 = vector.load %arg5[%c0_8, %c0_9] : memref<1x896xf32, #tpu.memory_space<vmem>>, vector<1x896xf32>
    %34 = vector.broadcast %33 : vector<1x896xf32> to vector<8x896xf32>
    %35 = arith.addf %32, %34 : vector<8x896xf32>
    %cst_10 = arith.constant 0.000000e+00 : f32
    %36 = vector.broadcast %cst_10 : f32 to vector<8x896xf32>
    %37 = arith.subf %36, %35 : vector<8x896xf32>
    %38 = math.exp %37 : vector<8x896xf32>
    %cst_11 = arith.constant 1.000000e+00 : f32
    %39 = vector.broadcast %cst_11 : f32 to vector<8x896xf32>
    %40 = arith.addf %39, %38 : vector<8x896xf32>
    %41 = tpu.reciprocal %40 {approx = true} : vector<8x896xf32> -> vector<8x896xf32>
    %c0_12 = arith.constant 0 : index
    %c0_13 = arith.constant 0 : index
    %42 = vector.load %arg6[%c0_12, %c0_13] : memref<8x896xf32, #tpu.memory_space<vmem>>, vector<8x896xf32>
    tpu.vector_store %arg6[%c0_12, %c0_13], %41 {strides = array<i32>} : memref<8x896xf32, #tpu.memory_space<vmem>>, vector<8x896xf32>,
    return
  }
  func.func @transform_0(%arg0: i32) -> (i32, i32) {
    %c0_i32 = arith.constant 0 : i32
    %c0_i32_0 = arith.constant 0 : i32
    return %arg0, %c0_i32 : i32, i32
  }
  func.func @transform_1(%arg0: i32) -> (i32, i32) {
    %c0_i32 = arith.constant 0 : i32
    %c0_i32_0 = arith.constant 0 : i32
    %c0_i32_1 = arith.constant 0 : i32
    return %c0_i32, %c0_i32_0 : i32, i32
  }
  func.func @transform_2(%arg0: i32) -> (i32, i32) {
    %c0_i32 = arith.constant 0 : i32
    %c0_i32_0 = arith.constant 0 : i32
    %c0_i32_1 = arith.constant 0 : i32
    return %c0_i32, %c0_i32_0 : i32, i32
  }
  func.func @transform_3(%arg0: i32) -> (i32, i32) {
    %c0_i32 = arith.constant 0 : i32
    %c0_i32_0 = arith.constant 0 : i32
    %c0_i32_1 = arith.constant 0 : i32
    return %c0_i32, %c0_i32_0 : i32, i32
  }
  func.func @transform_4(%arg0: i32) -> (i32, i32) {
    %c0_i32 = arith.constant 0 : i32
    %c0_i32_0 = arith.constant 0 : i32
    %c0_i32_1 = arith.constant 0 : i32
    return %c0_i32, %c0_i32_0 : i32, i32
  }
  func.func @transform_5(%arg0: i32) -> (i32, i32) {
    %c0_i32 = arith.constant 0 : i32
    %c0_i32_0 = arith.constant 0 : i32
    return %arg0, %c0_i32 : i32, i32
  }
}

</mosaic_0001>

<llo_original>
// kernel: tpu_custom_call.1
$region0: #{tpu_custom_call.1}
  #allocation0 [shape = 'u32[]', space=smem, size = 0x4, offset = 0x4, fixed_abs, tag = 'smem constant byte address 0x4 - core index']
  #allocation1 [shape = 'u32[144,128]{1,0:T(1,128)}', space=vmem, size = 0x12000, scoped, tag = 'internal scratch']
  %s0 = inlined_call_operand.vmem [shape: f32[16,4], index: 0, kind: input, shape index: {}]
  %s1 = inlined_call_operand.vmem [shape: f32[4,512], index: 1, kind: input, shape index: {}]
  %s2 = inlined_call_operand.vmem [shape: f32[1,512], index: 2, kind: input, shape index: {}]
  %s3 = inlined_call_operand.hbm [shape: bf16[512,896], index: 3, kind: input, shape index: {}]
  %s4 = inlined_call_operand.vmem [shape: f32[1,896], index: 4, kind: input, shape index: {}]
  %s5 = inlined_call_operand.hbm [shape: f32[16,896], index: 5, kind: output, shape index: {}]
  %s6 = sld [smem:[#allocation0]]
  $region57: #{tpu_custom_call.1} parent=0
    _
  %s8 = ssub.s32 1, %s6
  %s9 = scalar_select 0, %s8, %s6
  $region1: #{tpu_custom_call.1} parent=0
    #allocation2 [shape = 'u8[917504]{0}', space=vmem, size = 0xe0000, scoped, tag = 'input window, operand 3, single buffered']
    #allocation3 [shape = 's32[2]{0}', space=sflag, size = 0x8, scoped, tag = 'scoped memory for tpu_custom_call.1']
    #allocation4 [shape = 's32[2]{0}', space=sflag, size = 0x8, scoped, tag = 'scoped memory for tpu_custom_call.1']
    #allocation5 [shape = 'u8[57344]{0}', space=vmem, size = 0xe000, scoped, tag = 'output window, operand 0']
    %10 = vsyncpa [#allocation3], 0
    %11 = vsyncpa [#allocation4], 0
    %s12 = scalar_lea.sflag [#allocation4], 1
    %13 = vsyncpa %s12, 0
    loop: start=0, step=1, limit=4
    $region2: #{tpu_custom_call.1} parent=1 // loop_pre_header
      _
    $region3: #{tpu_custom_call.1} parent=1 // loop_header
      %s15 = sphi 0, %s19
      %p16 = scmp.ge.s32.totalorder %s15, 4
      %s25 = sphi 0, %s27
      %s28 = sphi 0, %s25
      %s29 = sphi 0, %s28
      %s45 = sphi 0, %s29
      %s49 = sphi 0, %s49
      %s51 = sphi 0, %s49
      %s52 = sphi 0, %s51
      %s66 = sphi 0, %s52
      %s70 = sphi 0, %s70
      %s72 = sphi 0, %s70
      %s73 = sphi 0, %s72
      %s87 = sphi 0, %s73
      %s91 = sphi 0, %s91
      %s93 = sphi 0, %s91
      %s94 = sphi 0, %s93
      %s108 = sphi 0, %s94
      %s112 = sphi 0, %s112
      %s114 = sphi 0, %s112
      %s115 = sphi 0, %s114
      %s129 = sphi 0, %s115
      %s135 = sphi 0, %s137
      %s138 = sphi 0, %s135
      %s139 = sphi 0, %s138
      %s155 = sphi 0, %s139
    $region4: #{tpu_custom_call.1} parent=1 // loop_header_branch
      %18 = sbr.rel (%p16) target = $region8
    $region5: #{tpu_custom_call.1} parent=1 // loop_body
      %s20 = ssub.s32 %s15, 1
      %s21 = ssub.s32 %s15, 2
      %s22 = sadd.s32 %s15, 1
      %s23 = ssub.s32 %s15, %s22
      %p24 = scmp.eq.s32.totalorder %s23, 0
      %s26 = sadd.s32 %s25, 1
      %s27 = scalar_select %p24, %s25, %s26
      %p30 = pneg %p24
      %p31 = scmp.eq.s32.totalorder %s15, 1
      %p32 = por %p30, %p31
      %p33 = scmp.ne.s32.totalorder %s25, %s28
      %p34 = scmp.eq.s32.totalorder %s15, 0
      %p35 = por %p33, %p34
      %p36 = scmp.ne.s32.totalorder %s25, %s28
      %p37 = scmp.eq.s32.totalorder %s20, 1
      %p38 = por %p36, %p37
      %p39 = scmp.ne.s32.totalorder %s28, %s29
      %p40 = scmp.eq.s32.totalorder %s20, 0
      %p41 = por %p39, %p40
      %p42 = scmp.ne.s32.totalorder %s28, %s29
      %p43 = scmp.eq.s32.totalorder %s21, 1
      %p44 = por %p42, %p43
      %p46 = scmp.ne.s32.totalorder %s29, %s45
      %p47 = scmp.eq.s32.totalorder %s21, 0
      %p48 = por %p46, %p47
      %s50 = sadd.s32 %s49, 1
      %p53 = scmp.eq.s32.totalorder %s15, 1
      %p54 = scmp.ne.s32.totalorder %s49, %s51
      %p55 = scmp.eq.s32.totalorder %s15, 0
      %p56 = por %p54, %p55
      %p57 = scmp.ne.s32.totalorder %s49, %s51
      %p58 = scmp.eq.s32.totalorder %s20, 1
      %p59 = por %p57, %p58
      %p60 = scmp.ne.s32.totalorder %s51, %s52
      %p61 = scmp.eq.s32.totalorder %s20, 0
      %p62 = por %p60, %p61
      %p63 = scmp.ne.s32.totalorder %s51, %s52
      %p64 = scmp.eq.s32.totalorder %s21, 1
      %p65 = por %p63, %p64
      %p67 = scmp.ne.s32.totalorder %s52, %s66
      %p68 = scmp.eq.s32.totalorder %s21, 0
      %p69 = por %p67, %p68
      %s71 = sadd.s32 %s70, 1
      %p74 = scmp.eq.s32.totalorder %s15, 1
      %p75 = scmp.ne.s32.totalorder %s70, %s72
      %p76 = scmp.eq.s32.totalorder %s15, 0
      %p77 = por %p75, %p76
      %p78 = scmp.ne.s32.totalorder %s70, %s72
      %p79 = scmp.eq.s32.totalorder %s20, 1
      %p80 = por %p78, %p79
      %p81 = scmp.ne.s32.totalorder %s72, %s73
      %p82 = scmp.eq.s32.totalorder %s20, 0
      %p83 = por %p81, %p82
      %p84 = scmp.ne.s32.totalorder %s72, %s73
      %p85 = scmp.eq.s32.totalorder %s21, 1
      %p86 = por %p84, %p85
      %p88 = scmp.ne.s32.totalorder %s73, %s87
      %p89 = scmp.eq.s32.totalorder %s21, 0
      %p90 = por %p88, %p89
      %s92 = sadd.s32 %s91, 1
      %p95 = scmp.eq.s32.totalorder %s15, 1
      %p96 = scmp.ne.s32.totalorder %s91, %s93
      %p97 = scmp.eq.s32.totalorder %s15, 0
      %p98 = por %p96, %p97
      %p99 = scmp.ne.s32.totalorder %s91, %s93
      %p100 = scmp.eq.s32.totalorder %s20, 1
      %p101 = por %p99, %p100
      %p102 = scmp.ne.s32.totalorder %s93, %s94
      %p103 = scmp.eq.s32.totalorder %s20, 0
      %p104 = por %p102, %p103
      %p105 = scmp.ne.s32.totalorder %s93, %s94
      %p106 = scmp.eq.s32.totalorder %s21, 1
      %p107 = por %p105, %p106
      %p109 = scmp.ne.s32.totalorder %s94, %s108
      %p110 = scmp.eq.s32.totalorder %s21, 0
      %p111 = por %p109, %p110
      %s113 = sadd.s32 %s112, 1
      %p116 = scmp.eq.s32.totalorder %s15, 1
      %p117 = scmp.ne.s32.totalorder %s112, %s114
      %p118 = scmp.eq.s32.totalorder %s15, 0
      %p119 = por %p117, %p118
      %p120 = scmp.ne.s32.totalorder %s112, %s114
      %p121 = scmp.eq.s32.totalorder %s20, 1
      %p122 = por %p120, %p121
      %p123 = scmp.ne.s32.totalorder %s114, %s115
      %p124 = scmp.eq.s32.totalorder %s20, 0
      %p125 = por %p123, %p124
      %p126 = scmp.ne.s32.totalorder %s114, %s115
      %p127 = scmp.eq.s32.totalorder %s21, 1
      %p128 = por %p126, %p127
      %p130 = scmp.ne.s32.totalorder %s115, %s129
      %p131 = scmp.eq.s32.totalorder %s21, 0
      %p132 = por %p130, %p131
      %s133 = ssub.s32 %s15, %s22
      %p134 = scmp.eq.s32.totalorder %s133, 0
      %s136 = sadd.s32 %s135, 1
      %s137 = scalar_select %p134, %s135, %s136
      %p140 = pneg %p134
      %p141 = scmp.eq.s32.totalorder %s15, 1
      %p142 = por %p140, %p141
      %p143 = scmp.ne.s32.totalorder %s135, %s138
      %p144 = scmp.eq.s32.totalorder %s15, 0
      %p145 = por %p143, %p144
      %p146 = scmp.ne.s32.totalorder %s135, %s138
      %p147 = scmp.eq.s32.totalorder %s20, 1
      %p148 = por %p146, %p147
      %p149 = scmp.ne.s32.totalorder %s138, %s139
      %p150 = scmp.eq.s32.totalorder %s20, 0
      %p151 = por %p149, %p150
      %p152 = scmp.ne.s32.totalorder %s138, %s139
      %p153 = scmp.eq.s32.totalorder %s21, 1
      %p154 = por %p152, %p153
      %p156 = scmp.ne.s32.totalorder %s139, %s155
      %p157 = scmp.eq.s32.totalorder %s21, 0
      %p158 = por %p156, %p157
      %p159 = scmp.le.s32.totalorder 1, %s15
      %p160 = scmp.lt.s32.totalorder %s15, 3
      %p161 = pnand %p159, %p160
      %p162 = pneg %p161
      // Predicated region
      $region9: #{tpu_custom_call.1} parent=5 // pred_check
        _
      $region10: #{tpu_custom_call.1} parent=5 // pred_check_branch
        %164 = sbr.rel (%p161) target = $region12
      $region11: #{tpu_custom_call.1} parent=5 // pred_region
        %s165 = ssub.s32 %s15, 1
        // Predicated region
        $region13: #{tpu_custom_call.1} parent=11 // pred_check
          %p166 = pneg %p62
        $region14: #{tpu_custom_call.1} parent=11 // pred_check_branch
          %168 = sbr.rel (%p166) target = $region16
        $region15: #{tpu_custom_call.1} parent=11 // pred_region
          _
        $region16: #{tpu_custom_call.1} parent=11 // pred_fallthru
          _
        // Predicated region
        $region17: #{tpu_custom_call.1} parent=11 // pred_check
          %p169 = pneg %p83
        $region18: #{tpu_custom_call.1} parent=11 // pred_check_branch
          %171 = sbr.rel (%p169) target = $region20
        $region19: #{tpu_custom_call.1} parent=11 // pred_region
          _
        $region20: #{tpu_custom_call.1} parent=11 // pred_fallthru
          _
        // Predicated region
        $region21: #{tpu_custom_call.1} parent=11 // pred_check
          %p172 = pneg %p104
        $region22: #{tpu_custom_call.1} parent=11 // pred_check_branch
          %174 = sbr.rel (%p172) target = $region24
        $region23: #{tpu_custom_call.1} parent=11 // pred_region
          %s176 = ssub.s32 28672, 28672
          %177 = vsyncadd [#allocation3], %s176
          %s178 = sshll.u32 [#allocation2], 4
          %s179 = int_to_ptr.vmem [resolvable:$true] %s178
          %184 = dma.hbm_to_vmem [thread:$0]  %s3, 28672, %s179, [#allocation3], 448, 448, 28
        $region24: #{tpu_custom_call.1} parent=11 // pred_fallthru
          _
        // Predicated region
        $region25: #{tpu_custom_call.1} parent=11 // pred_check
          %p185 = pneg %p125
        $region26: #{tpu_custom_call.1} parent=11 // pred_check_branch
          %187 = sbr.rel (%p185) target = $region28
        $region27: #{tpu_custom_call.1} parent=11 // pred_region
          _
        $region28: #{tpu_custom_call.1} parent=11 // pred_fallthru
          _
      $region12: #{tpu_custom_call.1} parent=5 // pred_fallthru
        _
      %p188 = scmp.lt.s32.totalorder %s15, 2
      // Predicated region
      $region29: #{tpu_custom_call.1} parent=5 // pred_check
        %p189 = pneg %p188
      $region30: #{tpu_custom_call.1} parent=5 // pred_check_branch
        %191 = sbr.rel (%p189) target = $region32
      $region31: #{tpu_custom_call.1} parent=5 // pred_region
        // Predicated region
        $region33: #{tpu_custom_call.1} parent=31 // pred_check
          %p192 = pneg %p35
        $region34: #{tpu_custom_call.1} parent=31 // pred_check_branch
          %194 = sbr.rel (%p192) target = $region36
        $region35: #{tpu_custom_call.1} parent=31 // pred_region
          %p195 = scmp.lt.s32.totalorder %s15, 1
          %s196 = scalar_select %p195, %s15, 1
          %s197 = smul.addr %s196, 8
          %s198 = scalar_lea.vmem %s0, %s197
        $region36: #{tpu_custom_call.1} parent=31 // pred_fallthru
          _
      $region32: #{tpu_custom_call.1} parent=5 // pred_fallthru
        _
      %p199 = scmp.le.s32.totalorder 1, %s15
      %p200 = scmp.lt.s32.totalorder %s15, 3
      %p201 = pnand %p199, %p200
      %p202 = pneg %p201
      // Predicated region
      $region37: #{tpu_custom_call.1} parent=5 // pred_check
        _
      $region38: #{tpu_custom_call.1} parent=5 // pred_check_branch
        %204 = sbr.rel (%p201) target = $region40
      $region39: #{tpu_custom_call.1} parent=5 // pred_region
        %s205 = ssub.s32 %s15, 1
        // Predicated region
        $region41: #{tpu_custom_call.1} parent=39 // pred_check
          %p206 = pneg %p104
        $region42: #{tpu_custom_call.1} parent=39 // pred_check_branch
          %208 = sbr.rel (%p206) target = $region44
        $region43: #{tpu_custom_call.1} parent=39 // pred_region
          %209 = dma.done [#allocation3], 28672
        $region44: #{tpu_custom_call.1} parent=39 // pred_fallthru
          _
        %p210 = scmp.lt.s32.totalorder %s20, 1
        %s211 = scalar_select %p210, %s20, 1
        %s212 = smul.addr %s211, 8
        %s213 = scalar_lea.vmem %s0, %s212
        %p214 = pneg %p41
        %p215 = pneg %p38
        %p216 = pneg %p62
        %p217 = pneg %p59
        %p218 = pneg %p83
        %p219 = pneg %p80
        %p220 = pneg %p104
        %p221 = pneg %p101
        %p222 = pneg %p125
        %p223 = pneg %p122
        %p224 = pneg %p151
        %p225 = pneg %p148
        %s226 = sand.u32 %s138, 1
        %s227 = scalar_lea.sflag [#allocation4], %s226
        %s228 = sand.u32 %s138, 1
        %s229 = smul.addr %s228, 56
        %s230 = scalar_lea.vmem [#allocation5], %s229
        %p231 = scmp.lt.s32.totalorder %s20, 1
        %s232 = scalar_select %p231, %s20, 1
        %s233 = smul.addr %s232, 8
        %s234 = scalar_lea.vmem %s0, %s233
        %v236 = vld [vmem:[%s234] sm:$0xff]
        %v237 = vld [vmem:[%s1] sm:$0xff]
        %v238 = vld [vmem:[%s1 + $0x8] sm:$0xff]
        %v239 = vld [vmem:[%s2] sm:$0xf]
        %241 = vset.pattern.permute.xlu0 0
        %242 = vperm.xlu0 %241, %v236
        %v243 = vpop.permute.xlu0 %242
        %v247 = vlaneseq
        %v248 = vshrl.u32 %v247, 7
        %v249 = vsub.s32 0, %v248
        %v250 = vrot.slane %v237, %v249
        %v251 = vlaneseq
        %v252 = vshrl.u32 %v251, 7
        %v253 = vsub.s32 4, %v252
        %v254 = vrot.slane %v237, %v253
        %v255 = vlaneseq
        %v256 = vshrl.u32 %v255, 7
        %v257 = vsub.s32 0, %v256
        %v258 = vrot.slane %v238, %v257
        %v259 = vlaneseq
        %v260 = vshrl.u32 %v259, 7
        %v261 = vsub.s32 4, %v260
        %v262 = vrot.slane %v238, %v261
        %v267 = vlaneseq
        %v268 = vshrl.u32 %v267, 7
        %v269 = vsub.s32 0, %v268
        %v270 = vrot.slane %v250, %v269
        %v271 = vlaneseq
        %v272 = vshrl.u32 %v271, 7
        %v273 = vsub.s32 0, %v272
        %v274 = vrot.slane %v254, %v273
        %v275 = vlaneseq
        %v276 = vshrl.u32 %v275, 7
        %v277 = vsub.s32 0, %v276
        %v278 = vrot.slane %v258, %v277
        %v279 = vlaneseq
        %v280 = vshrl.u32 %v279, 7
        %v281 = vsub.s32 0, %v280
        %v282 = vrot.slane %v262, %v281
        %v283 = vmul.f32 %v243, %v270
        %v284 = vmul.f32 %v243, %v274
        %v285 = vmul.f32 %v243, %v278
        %v286 = vmul.f32 %v243, %v282
        %v288 = vlaneseq
        %v289 = vshrl.u32 %v288, 7
        %v290 = vsub.s32 0, %v289
        %v291 = vrot.slane %v239, %v290
        %v292 = vlaneseq
        %v293 = vshrl.u32 %v292, 7
        %v294 = vsub.s32 1, %v293
        %v295 = vrot.slane %v239, %v294
        %v296 = vlaneseq
        %v297 = vshrl.u32 %v296, 7
        %v298 = vsub.s32 2, %v297
        %v299 = vrot.slane %v239, %v298
        %v300 = vlaneseq
        %v301 = vshrl.u32 %v300, 7
        %v302 = vsub.s32 3, %v301
        %v303 = vrot.slane %v239, %v302
        %v308 = vadd.f32 %v291, %v283
        %v309 = vadd.f32 %v295, %v284
        %v310 = vadd.f32 %v299, %v285
        %v311 = vadd.f32 %v303, %v286
        %312 = vset.pattern.permute.xlu0 1
        %313 = vperm.xlu0 %312, %v236
        %v314 = vpop.permute.xlu0 %313
        %v316 = vlaneseq
        %v317 = vshrl.u32 %v316, 7
        %v318 = vsub.s32 1, %v317
        %v319 = vrot.slane %v237, %v318
        %v320 = vlaneseq
        %v321 = vshrl.u32 %v320, 7
        %v322 = vsub.s32 5, %v321
        %v323 = vrot.slane %v237, %v322
        %v324 = vlaneseq
        %v325 = vshrl.u32 %v324, 7
        %v326 = vsub.s32 1, %v325
        %v327 = vrot.slane %v238, %v326
        %v328 = vlaneseq
        %v329 = vshrl.u32 %v328, 7
        %v330 = vsub.s32 5, %v329
        %v331 = vrot.slane %v238, %v330
        %v336 = vlaneseq
        %v337 = vshrl.u32 %v336, 7
        %v338 = vsub.s32 1, %v337
        %v339 = vrot.slane %v319, %v338
        %v340 = vlaneseq
        %v341 = vshrl.u32 %v340, 7
        %v342 = vsub.s32 1, %v341
        %v343 = vrot.slane %v323, %v342
        %v344 = vlaneseq
        %v345 = vshrl.u32 %v344, 7
        %v346 = vsub.s32 1, %v345
        %v347 = vrot.slane %v327, %v346
        %v348 = vlaneseq
        %v349 = vshrl.u32 %v348, 7
        %v350 = vsub.s32 1, %v349
        %v351 = vrot.slane %v331, %v350
        %v352 = vmul.f32 %v314, %v339
        %v353 = vmul.f32 %v314, %v343
        %v354 = vmul.f32 %v314, %v347
        %v355 = vmul.f32 %v314, %v351
        %v356 = vadd.f32 %v308, %v352
        %v357 = vadd.f32 %v309, %v353
        %v358 = vadd.f32 %v310, %v354
        %v359 = vadd.f32 %v311, %v355
        %360 = vset.pattern.permute.xlu0 2
        %361 = vperm.xlu0 %360, %v236
        %v362 = vpop.permute.xlu0 %361
        %v364 = vlaneseq
        %v365 = vshrl.u32 %v364, 7
        %v366 = vsub.s32 2, %v365
        %v367 = vrot.slane %v237, %v366
        %v368 = vlaneseq
        %v369 = vshrl.u32 %v368, 7
        %v370 = vsub.s32 6, %v369
        %v371 = vrot.slane %v237, %v370
        %v372 = vlaneseq
        %v373 = vshrl.u32 %v372, 7
        %v374 = vsub.s32 2, %v373
        %v375 = vrot.slane %v238, %v374
        %v376 = vlaneseq
        %v377 = vshrl.u32 %v376, 7
        %v378 = vsub.s32 6, %v377
        %v379 = vrot.slane %v238, %v378
        %v384 = vlaneseq
        %v385 = vshrl.u32 %v384, 7
        %v386 = vsub.s32 2, %v385
        %v387 = vrot.slane %v367, %v386
        %v388 = vlaneseq
        %v389 = vshrl.u32 %v388, 7
        %v390 = vsub.s32 2, %v389
        %v391 = vrot.slane %v371, %v390
        %v392 = vlaneseq
        %v393 = vshrl.u32 %v392, 7
        %v394 = vsub.s32 2, %v393
        %v395 = vrot.slane %v375, %v394
        %v396 = vlaneseq
        %v397 = vshrl.u32 %v396, 7
        %v398 = vsub.s32 2, %v397
        %v399 = vrot.slane %v379, %v398
        %v400 = vmul.f32 %v362, %v387
        %v401 = vmul.f32 %v362, %v391
        %v402 = vmul.f32 %v362, %v395
        %v403 = vmul.f32 %v362, %v399
        %v404 = vadd.f32 %v356, %v400
        %v405 = vadd.f32 %v357, %v401
        %v406 = vadd.f32 %v358, %v402
        %v407 = vadd.f32 %v359, %v403
        %408 = vset.pattern.permute.xlu0 3
        %409 = vperm.xlu0 %408, %v236
        %v410 = vpop.permute.xlu0 %409
        %v412 = vlaneseq
        %v413 = vshrl.u32 %v412, 7
        %v414 = vsub.s32 3, %v413
        %v415 = vrot.slane %v237, %v414
        %v416 = vlaneseq
        %v417 = vshrl.u32 %v416, 7
        %v418 = vsub.s32 7, %v417
        %v419 = vrot.slane %v237, %v418
        %v420 = vlaneseq
        %v421 = vshrl.u32 %v420, 7
        %v422 = vsub.s32 3, %v421
        %v423 = vrot.slane %v238, %v422
        %v424 = vlaneseq
        %v425 = vshrl.u32 %v424, 7
        %v426 = vsub.s32 7, %v425
        %v427 = vrot.slane %v238, %v426
        %v432 = vlaneseq
        %v433 = vshrl.u32 %v432, 7
        %v434 = vsub.s32 3, %v433
        %v435 = vrot.slane %v415, %v434
        %v436 = vlaneseq
        %v437 = vshrl.u32 %v436, 7
        %v438 = vsub.s32 3, %v437
        %v439 = vrot.slane %v419, %v438
        %v440 = vlaneseq
        %v441 = vshrl.u32 %v440, 7
        %v442 = vsub.s32 3, %v441
        %v443 = vrot.slane %v423, %v442
        %v444 = vlaneseq
        %v445 = vshrl.u32 %v444, 7
        %v446 = vsub.s32 3, %v445
        %v447 = vrot.slane %v427, %v446
        %v448 = vmul.f32 %v410, %v435
        %v449 = vmul.f32 %v410, %v439
        %v450 = vmul.f32 %v410, %v443
        %v451 = vmul.f32 %v410, %v447
        %v452 = vadd.f32 %v404, %v448
        %v453 = vadd.f32 %v405, %v449
        %v454 = vadd.f32 %v406, %v450
        %v455 = vadd.f32 %v407, %v451
        %v456 = vmax.f32 %v452, 0.0
        %v457 = vmax.f32 %v453, 0.0
        %v458 = vmax.f32 %v454, 0.0
        %v459 = vmax.f32 %v455, 0.0
        %v460 = vpack.c.bf16 %v456, %v456
        %v461 = vpack.c.bf16 %v457, %v457
        %v462 = vpack.c.bf16 %v458, %v458
        %v463 = vpack.c.bf16 %v459, %v459
        %v464 = vld [vmem:[#allocation2] sm:$0xff]
        %v465 = vld [vmem:[#allocation2 + $0x8] sm:$0xff]
        %v466 = vld [vmem:[#allocation2 + $0x10] sm:$0xff]
        %v467 = vld [vmem:[#allocation2 + $0x18] sm:$0xf]
        %v468 = vld [vmem:[#allocation2 + $0x1c] sm:$0xff]
        %v469 = vld [vmem:[#allocation2 + $0x24] sm:$0xff]
        %v470 = vld [vmem:[#allocation2 + $0x2c] sm:$0xff]
        %v471 = vld [vmem:[#allocation2 + $0x34] sm:$0xf]
        %v472 = vld [vmem:[#allocation2 + $0x38] sm:$0xff]
        %v473 = vld [vmem:[#allocation2 + $0x40] sm:$0xff]
        %v474 = vld [vmem:[#allocation2 + $0x48] sm:$0xff]
        %v475 = vld [vmem:[#allocation2 + $0x50] sm:$0xf]
        %v476 = vld [vmem:[#allocation2 + $0x54] sm:$0xff]
        %v477 = vld [vmem:[#allocation2 + $0x5c] sm:$0xff]
        %v478 = vld [vmem:[#allocation2 + $0x64] sm:$0xff]
        %v479 = vld [vmem:[#allocation2 + $0x6c] sm:$0xf]
        %v480 = vld [vmem:[#allocation2 + $0x70] sm:$0xff]
        %v481 = vld [vmem:[#allocation2 + $0x78] sm:$0xff]
        %v482 = vld [vmem:[#allocation2 + $0x80] sm:$0xff]
        %v483 = vld [vmem:[#allocation2 + $0x88] sm:$0xf]
        %v484 = vld [vmem:[#allocation2 + $0x8c] sm:$0xff]
        %v485 = vld [vmem:[#allocation2 + $0x94] sm:$0xff]
        %v486 = vld [vmem:[#allocation2 + $0x9c] sm:$0xff]
        %v487 = vld [vmem:[#allocation2 + $0xa4] sm:$0xf]
        %v488 = vld [vmem:[#allocation2 + $0xa8] sm:$0xff]
        %v489 = vld [vmem:[#allocation2 + $0xb0] sm:$0xff]
        %v490 = vld [vmem:[#allocation2 + $0xb8] sm:$0xff]
        %v491 = vld [vmem:[#allocation2 + $0xc0] sm:$0xf]
        %v492 = vld [vmem:[#allocation2 + $0xc4] sm:$0xff]
        %v493 = vld [vmem:[#allocation2 + $0xcc] sm:$0xff]
        %v494 = vld [vmem:[#allocation2 + $0xd4] sm:$0xff]
        %v495 = vld [vmem:[#allocation2 + $0xdc] sm:$0xf]
        %v496 = vld [vmem:[#allocation2 + $0xe0] sm:$0xff]
        %v497 = vld [vmem:[#allocation2 + $0xe8] sm:$0xff]
        %v498 = vld [vmem:[#allocation2 + $0xf0] sm:$0xff]
        %v499 = vld [vmem:[#allocation2 + $0xf8] sm:$0xf]
        %v500 = vld [vmem:[#allocation2 + $0xfc] sm:$0xff]
        %v501 = vld [vmem:[#allocation2 + $0x104] sm:$0xff]
        %v502 = vld [vmem:[#allocation2 + $0x10c] sm:$0xff]
        %v503 = vld [vmem:[#allocation2 + $0x114] sm:$0xf]
        %v504 = vld [vmem:[#allocation2 + $0x118] sm:$0xff]
        %v505 = vld [vmem:[#allocation2 + $0x120] sm:$0xff]
        %v506 = vld [vmem:[#allocation2 + $0x128] sm:$0xff]
        %v507 = vld [vmem:[#allocation2 + $0x130] sm:$0xf]
        %v508 = vld [vmem:[#allocation2 + $0x134] sm:$0xff]
        %v509 = vld [vmem:[#allocation2 + $0x13c] sm:$0xff]
        %v510 = vld [vmem:[#allocation2 + $0x144] sm:$0xff]
        %v511 = vld [vmem:[#allocation2 + $0x14c] sm:$0xf]
        %v512 = vld [vmem:[#allocation2 + $0x150] sm:$0xff]
        %v513 = vld [vmem:[#allocation2 + $0x158] sm:$0xff]
        %v514 = vld [vmem:[#allocation2 + $0x160] sm:$0xff]
        %v515 = vld [vmem:[#allocation2 + $0x168] sm:$0xf]
        %v516 = vld [vmem:[#allocation2 + $0x16c] sm:$0xff]
        %v517 = vld [vmem:[#allocation2 + $0x174] sm:$0xff]
        %v518 = vld [vmem:[#allocation2 + $0x17c] sm:$0xff]
        %v519 = vld [vmem:[#allocation2 + $0x184] sm:$0xf]
        %v520 = vld [vmem:[#allocation2 + $0x188] sm:$0xff]
        %v521 = vld [vmem:[#allocation2 + $0x190] sm:$0xff]
        %v522 = vld [vmem:[#allocation2 + $0x198] sm:$0xff]
        %v523 = vld [vmem:[#allocation2 + $0x1a0] sm:$0xf]
        %v524 = vld [vmem:[#allocation2 + $0x1a4] sm:$0xff]
        %v525 = vld [vmem:[#allocation2 + $0x1ac] sm:$0xff]
        %v526 = vld [vmem:[#allocation2 + $0x1b4] sm:$0xff]
        %v527 = vld [vmem:[#allocation2 + $0x1bc] sm:$0xf]
        %v528 = vld [vmem:[#allocation2 + $0x1c0] sm:$0xff]
        %v529 = vld [vmem:[#allocation2 + $0x1c8] sm:$0xff]
        %v530 = vld [vmem:[#allocation2 + $0x1d0] sm:$0xff]
        %v531 = vld [vmem:[#allocation2 + $0x1d8] sm:$0xf]
        %v532 = vld [vmem:[#allocation2 + $0x1dc] sm:$0xff]
        %v533 = vld [vmem:[#allocation2 + $0x1e4] sm:$0xff]
        %v534 = vld [vmem:[#allocation2 + $0x1ec] sm:$0xff]
        %v535 = vld [vmem:[#allocation2 + $0x1f4] sm:$0xf]
        %v536 = vld [vmem:[#allocation2 + $0x1f8] sm:$0xff]
        %v537 = vld [vmem:[#allocation2 + $0x200] sm:$0xff]
        %v538 = vld [vmem:[#allocation2 + $0x208] sm:$0xff]
        %v539 = vld [vmem:[#allocation2 + $0x210] sm:$0xf]
        %v540 = vld [vmem:[#allocation2 + $0x214] sm:$0xff]
        %v541 = vld [vmem:[#allocation2 + $0x21c] sm:$0xff]
        %v542 = vld [vmem:[#allocation2 + $0x224] sm:$0xff]
        %v543 = vld [vmem:[#allocation2 + $0x22c] sm:$0xf]
        %v544 = vld [vmem:[#allocation2 + $0x230] sm:$0xff]
        %v545 = vld [vmem:[#allocation2 + $0x238] sm:$0xff]
        %v546 = vld [vmem:[#allocation2 + $0x240] sm:$0xff]
        %v547 = vld [vmem:[#allocation2 + $0x248] sm:$0xf]
        %v548 = vld [vmem:[#allocation2 + $0x24c] sm:$0xff]
        %v549 = vld [vmem:[#allocation2 + $0x254] sm:$0xff]
        %v550 = vld [vmem:[#allocation2 + $0x25c] sm:$0xff]
        %v551 = vld [vmem:[#allocation2 + $0x264] sm:$0xf]
        %v552 = vld [vmem:[#allocation2 + $0x268] sm:$0xff]
        %v553 = vld [vmem:[#allocation2 + $0x270] sm:$0xff]
        %v554 = vld [vmem:[#allocation2 + $0x278] sm:$0xff]
        %v555 = vld [vmem:[#allocation2 + $0x280] sm:$0xf]
        %v556 = vld [vmem:[#allocation2 + $0x284] sm:$0xff]
        %v557 = vld [vmem:[#allocation2 + $0x28c] sm:$0xff]
        %v558 = vld [vmem:[#allocation2 + $0x294] sm:$0xff]
        %v559 = vld [vmem:[#allocation2 + $0x29c] sm:$0xf]
        %v560 = vld [vmem:[#allocation2 + $0x2a0] sm:$0xff]
        %v561 = vld [vmem:[#allocation2 + $0x2a8] sm:$0xff]
        %v562 = vld [vmem:[#allocation2 + $0x2b0] sm:$0xff]
        %v563 = vld [vmem:[#allocation2 + $0x2b8] sm:$0xf]
        %v564 = vld [vmem:[#allocation2 + $0x2bc] sm:$0xff]
        %v565 = vld [vmem:[#allocation2 + $0x2c4] sm:$0xff]
        %v566 = vld [vmem:[#allocation2 + $0x2cc] sm:$0xff]
        %v567 = vld [vmem:[#allocation2 + $0x2d4] sm:$0xf]
        %v568 = vld [vmem:[#allocation2 + $0x2d8] sm:$0xff]
        %v569 = vld [vmem:[#allocation2 + $0x2e0] sm:$0xff]
        %v570 = vld [vmem:[#allocation2 + $0x2e8] sm:$0xff]
        %v571 = vld [vmem:[#allocation2 + $0x2f0] sm:$0xf]
        %v572 = vld [vmem:[#allocation2 + $0x2f4] sm:$0xff]
        %v573 = vld [vmem:[#allocation2 + $0x2fc] sm:$0xff]
        %v574 = vld [vmem:[#allocation2 + $0x304] sm:$0xff]
        %v575 = vld [vmem:[#allocation2 + $0x30c] sm:$0xf]
        %v576 = vld [vmem:[#allocation2 + $0x310] sm:$0xff]
        %v577 = vld [vmem:[#allocation2 + $0x318] sm:$0xff]
        %v578 = vld [vmem:[#allocation2 + $0x320] sm:$0xff]
        %v579 = vld [vmem:[#allocation2 + $0x328] sm:$0xf]
        %v580 = vld [vmem:[#allocation2 + $0x32c] sm:$0xff]
        %v581 = vld [vmem:[#allocation2 + $0x334] sm:$0xff]
        %v582 = vld [vmem:[#allocation2 + $0x33c] sm:$0xff]
        %v583 = vld [vmem:[#allocation2 + $0x344] sm:$0xf]
        %v584 = vld [vmem:[#allocation2 + $0x348] sm:$0xff]
        %v585 = vld [vmem:[#allocation2 + $0x350] sm:$0xff]
        %v586 = vld [vmem:[#allocation2 + $0x358] sm:$0xff]
        %v587 = vld [vmem:[#allocation2 + $0x360] sm:$0xf]
        %v588 = vld [vmem:[#allocation2 + $0x364] sm:$0xff]
        %v589 = vld [vmem:[#allocation2 + $0x36c] sm:$0xff]
        %v590 = vld [vmem:[#allocation2 + $0x374] sm:$0xff]
        %v591 = vld [vmem:[#allocation2 + $0x37c] sm:$0xf]
        %v592 = vld [vmem:[#allocation2 + $0x380] sm:$0xff]
        %v593 = vld [vmem:[#allocation2 + $0x388] sm:$0xff]
        %v594 = vld [vmem:[#allocation2 + $0x390] sm:$0xff]
        %v595 = vld [vmem:[#allocation2 + $0x398] sm:$0xf]
        %v596 = vld [vmem:[#allocation2 + $0x39c] sm:$0xff]
        %v597 = vld [vmem:[#allocation2 + $0x3a4] sm:$0xff]
        %v598 = vld [vmem:[#allocation2 + $0x3ac] sm:$0xff]
        %v599 = vld [vmem:[#allocation2 + $0x3b4] sm:$0xf]
        %v600 = vld [vmem:[#allocation2 + $0x3b8] sm:$0xff]
        %v601 = vld [vmem:[#allocation2 + $0x3c0] sm:$0xff]
        %v602 = vld [vmem:[#allocation2 + $0x3c8] sm:$0xff]
        %v603 = vld [vmem:[#allocation2 + $0x3d0] sm:$0xf]
        %v604 = vld [vmem:[#allocation2 + $0x3d4] sm:$0xff]
        %v605 = vld [vmem:[#allocation2 + $0x3dc] sm:$0xff]
        %v606 = vld [vmem:[#allocation2 + $0x3e4] sm:$0xff]
        %v607 = vld [vmem:[#allocation2 + $0x3ec] sm:$0xf]
        %v608 = vld [vmem:[#allocation2 + $0x3f0] sm:$0xff]
        %v609 = vld [vmem:[#allocation2 + $0x3f8] sm:$0xff]
        %v610 = vld [vmem:[#allocation2 + $0x400] sm:$0xff]
        %v611 = vld [vmem:[#allocation2 + $0x408] sm:$0xf]
        %v612 = vld [vmem:[#allocation2 + $0x40c] sm:$0xff]
        %v613 = vld [vmem:[#allocation2 + $0x414] sm:$0xff]
        %v614 = vld [vmem:[#allocation2 + $0x41c] sm:$0xff]
        %v615 = vld [vmem:[#allocation2 + $0x424] sm:$0xf]
        %v616 = vld [vmem:[#allocation2 + $0x428] sm:$0xff]
        %v617 = vld [vmem:[#allocation2 + $0x430] sm:$0xff]
        %v618 = vld [vmem:[#allocation2 + $0x438] sm:$0xff]
        %v619 = vld [vmem:[#allocation2 + $0x440] sm:$0xf]
        %v620 = vld [vmem:[#allocation2 + $0x444] sm:$0xff]
        %v621 = vld [vmem:[#allocation2 + $0x44c] sm:$0xff]
        %v622 = vld [vmem:[#allocation2 + $0x454] sm:$0xff]
        %v623 = vld [vmem:[#allocation2 + $0x45c] sm:$0xf]
        %v624 = vld [vmem:[#allocation2 + $0x460] sm:$0xff]
        %v625 = vld [vmem:[#allocation2 + $0x468] sm:$0xff]
        %v626 = vld [vmem:[#allocation2 + $0x470] sm:$0xff]
        %v627 = vld [vmem:[#allocation2 + $0x478] sm:$0xf]
        %v628 = vld [vmem:[#allocation2 + $0x47c] sm:$0xff]
        %v629 = vld [vmem:[#allocation2 + $0x484] sm:$0xff]
        %v630 = vld [vmem:[#allocation2 + $0x48c] sm:$0xff]
        %v631 = vld [vmem:[#allocation2 + $0x494] sm:$0xf]
        %v632 = vld [vmem:[#allocation2 + $0x498] sm:$0xff]
        %v633 = vld [vmem:[#allocation2 + $0x4a0] sm:$0xff]
        %v634 = vld [vmem:[#allocation2 + $0x4a8] sm:$0xff]
        %v635 = vld [vmem:[#allocation2 + $0x4b0] sm:$0xf]
        %v636 = vld [vmem:[#allocation2 + $0x4b4] sm:$0xff]
        %v637 = vld [vmem:[#allocation2 + $0x4bc] sm:$0xff]
        %v638 = vld [vmem:[#allocation2 + $0x4c4] sm:$0xff]
        %v639 = vld [vmem:[#allocation2 + $0x4cc] sm:$0xf]
        %v640 = vld [vmem:[#allocation2 + $0x4d0] sm:$0xff]
        %v641 = vld [vmem:[#allocation2 + $0x4d8] sm:$0xff]
        %v642 = vld [vmem:[#allocation2 + $0x4e0] sm:$0xff]
        %v643 = vld [vmem:[#allocation2 + $0x4e8] sm:$0xf]
        %v644 = vld [vmem:[#allocation2 + $0x4ec] sm:$0xff]
        %v645 = vld [vmem:[#allocation2 + $0x4f4] sm:$0xff]
        %v646 = vld [vmem:[#allocation2 + $0x4fc] sm:$0xff]
        %v647 = vld [vmem:[#allocation2 + $0x504] sm:$0xf]
        %v648 = vld [vmem:[#allocation2 + $0x508] sm:$0xff]
        %v649 = vld [vmem:[#allocation2 + $0x510] sm:$0xff]
        %v650 = vld [vmem:[#allocation2 + $0x518] sm:$0xff]
        %v651 = vld [vmem:[#allocation2 + $0x520] sm:$0xf]
        %v652 = vld [vmem:[#allocation2 + $0x524] sm:$0xff]
        %v653 = vld [vmem:[#allocation2 + $0x52c] sm:$0xff]
        %v654 = vld [vmem:[#allocation2 + $0x534] sm:$0xff]
        %v655 = vld [vmem:[#allocation2 + $0x53c] sm:$0xf]
        %v656 = vld [vmem:[#allocation2 + $0x540] sm:$0xff]
        %v657 = vld [vmem:[#allocation2 + $0x548] sm:$0xff]
        %v658 = vld [vmem:[#allocation2 + $0x550] sm:$0xff]
        %v659 = vld [vmem:[#allocation2 + $0x558] sm:$0xf]
        %v660 = vld [vmem:[#allocation2 + $0x55c] sm:$0xff]
        %v661 = vld [vmem:[#allocation2 + $0x564] sm:$0xff]
        %v662 = vld [vmem:[#allocation2 + $0x56c] sm:$0xff]
        %v663 = vld [vmem:[#allocation2 + $0x574] sm:$0xf]
        %v664 = vld [vmem:[#allocation2 + $0x578] sm:$0xff]
        %v665 = vld [vmem:[#allocation2 + $0x580] sm:$0xff]
        %v666 = vld [vmem:[#allocation2 + $0x588] sm:$0xff]
        %v667 = vld [vmem:[#allocation2 + $0x590] sm:$0xf]
        %v668 = vld [vmem:[#allocation2 + $0x594] sm:$0xff]
        %v669 = vld [vmem:[#allocation2 + $0x59c] sm:$0xff]
        %v670 = vld [vmem:[#allocation2 + $0x5a4] sm:$0xff]
        %v671 = vld [vmem:[#allocation2 + $0x5ac] sm:$0xf]
        %v672 = vld [vmem:[#allocation2 + $0x5b0] sm:$0xff]
        %v673 = vld [vmem:[#allocation2 + $0x5b8] sm:$0xff]
        %v674 = vld [vmem:[#allocation2 + $0x5c0] sm:$0xff]
        %v675 = vld [vmem:[#allocation2 + $0x5c8] sm:$0xf]
        %v676 = vld [vmem:[#allocation2 + $0x5cc] sm:$0xff]
        %v677 = vld [vmem:[#allocation2 + $0x5d4] sm:$0xff]
        %v678 = vld [vmem:[#allocation2 + $0x5dc] sm:$0xff]
        %v679 = vld [vmem:[#allocation2 + $0x5e4] sm:$0xf]
        %v680 = vld [vmem:[#allocation2 + $0x5e8] sm:$0xff]
        %v681 = vld [vmem:[#allocation2 + $0x5f0] sm:$0xff]
        %v682 = vld [vmem:[#allocation2 + $0x5f8] sm:$0xff]
        %v683 = vld [vmem:[#allocation2 + $0x600] sm:$0xf]
        %v684 = vld [vmem:[#allocation2 + $0x604] sm:$0xff]
        %v685 = vld [vmem:[#allocation2 + $0x60c] sm:$0xff]
        %v686 = vld [vmem:[#allocation2 + $0x614] sm:$0xff]
        %v687 = vld [vmem:[#allocation2 + $0x61c] sm:$0xf]
        %v688 = vld [vmem:[#allocation2 + $0x620] sm:$0xff]
        %v689 = vld [vmem:[#allocation2 + $0x628] sm:$0xff]
        %v690 = vld [vmem:[#allocation2 + $0x630] sm:$0xff]
        %v691 = vld [vmem:[#allocation2 + $0x638] sm:$0xf]
        %v692 = vld [vmem:[#allocation2 + $0x63c] sm:$0xff]
        %v693 = vld [vmem:[#allocation2 + $0x644] sm:$0xff]
        %v694 = vld [vmem:[#allocation2 + $0x64c] sm:$0xff]
        %v695 = vld [vmem:[#allocation2 + $0x654] sm:$0xf]
        %v696 = vld [vmem:[#allocation2 + $0x658] sm:$0xff]
        %v697 = vld [vmem:[#allocation2 + $0x660] sm:$0xff]
        %v698 = vld [vmem:[#allocation2 + $0x668] sm:$0xff]
        %v699 = vld [vmem:[#allocation2 + $0x670] sm:$0xf]
        %v700 = vld [vmem:[#allocation2 + $0x674] sm:$0xff]
        %v701 = vld [vmem:[#allocation2 + $0x67c] sm:$0xff]
        %v702 = vld [vmem:[#allocation2 + $0x684] sm:$0xff]
        %v703 = vld [vmem:[#allocation2 + $0x68c] sm:$0xf]
        %v704 = vld [vmem:[#allocation2 + $0x690] sm:$0xff]
        %v705 = vld [vmem:[#allocation2 + $0x698] sm:$0xff]
        %v706 = vld [vmem:[#allocation2 + $0x6a0] sm:$0xff]
        %v707 = vld [vmem:[#allocation2 + $0x6a8] sm:$0xf]
        %v708 = vld [vmem:[#allocation2 + $0x6ac] sm:$0xff]
        %v709 = vld [vmem:[#allocation2 + $0x6b4] sm:$0xff]
        %v710 = vld [vmem:[#allocation2 + $0x6bc] sm:$0xff]
        %v711 = vld [vmem:[#allocation2 + $0x6c4] sm:$0xf]
        %v712 = vld [vmem:[#allocation2 + $0x6c8] sm:$0xff]
        %v713 = vld [vmem:[#allocation2 + $0x6d0] sm:$0xff]
        %v714 = vld [vmem:[#allocation2 + $0x6d8] sm:$0xff]
        %v715 = vld [vmem:[#allocation2 + $0x6e0] sm:$0xf]
        %v716 = vld [vmem:[#allocation2 + $0x6e4] sm:$0xff]
        %v717 = vld [vmem:[#allocation2 + $0x6ec] sm:$0xff]
        %v718 = vld [vmem:[#allocation2 + $0x6f4] sm:$0xff]
        %v719 = vld [vmem:[#allocation2 + $0x6fc] sm:$0xf]
        %v720 = vld [vmem:[%s4] sm:$0xff]
        %v722 = vlaneseq
        %v723 = vshrl.u32 %v722, 7
        %v724 = vsub.s32 0, %v723
        %v725 = vrot.slane %v720, %v724
        %v726 = vlaneseq
        %v727 = vshrl.u32 %v726, 7
        %v728 = vsub.s32 1, %v727
        %v729 = vrot.slane %v720, %v728
        %v730 = vlaneseq
        %v731 = vshrl.u32 %v730, 7
        %v732 = vsub.s32 2, %v731
        %v733 = vrot.slane %v720, %v732
        %v734 = vlaneseq
        %v735 = vshrl.u32 %v734, 7
        %v736 = vsub.s32 3, %v735
        %v737 = vrot.slane %v720, %v736
        %v738 = vlaneseq
        %v739 = vshrl.u32 %v738, 7
        %v740 = vsub.s32 4, %v739
        %v741 = vrot.slane %v720, %v740
        %v742 = vlaneseq
        %v743 = vshrl.u32 %v742, 7
        %v744 = vsub.s32 5, %v743
        %v745 = vrot.slane %v720, %v744
        %v746 = vlaneseq
        %v747 = vshrl.u32 %v746, 7
        %v748 = vsub.s32 6, %v747
        %v749 = vrot.slane %v720, %v748
        %v1013 = vunpack.c.l.b16 %v464
        %v1014 = vunpack.c.h.b16 %v464
        %v1015 = vunpack.c.l.b16 %v465
        %v1016 = vunpack.c.h.b16 %v465
        %v1017 = vunpack.c.l.b16 %v466
        %v1018 = vunpack.c.h.b16 %v466
        %v1019 = vunpack.c.l.b16 %v467
        %v1020 = vunpack.c.l.b16 %v468
        %v1021 = vunpack.c.h.b16 %v468
        %v1022 = vunpack.c.l.b16 %v469
        %v1023 = vunpack.c.h.b16 %v469
        %v1024 = vunpack.c.l.b16 %v470
        %v1025 = vunpack.c.h.b16 %v470
        %v1026 = vunpack.c.l.b16 %v471
        %v1027 = vunpack.c.l.b16 %v472
        %v1028 = vunpack.c.h.b16 %v472
        %v1029 = vunpack.c.l.b16 %v473
        %v1030 = vunpack.c.h.b16 %v473
        %v1031 = vunpack.c.l.b16 %v474
        %v1032 = vunpack.c.h.b16 %v474
        %v1033 = vunpack.c.l.b16 %v475
        %v1034 = vunpack.c.l.b16 %v476
        %v1035 = vunpack.c.h.b16 %v476
        %v1036 = vunpack.c.l.b16 %v477
        %v1037 = vunpack.c.h.b16 %v477
        %v1038 = vunpack.c.l.b16 %v478
        %v1039 = vunpack.c.h.b16 %v478
        %v1040 = vunpack.c.l.b16 %v479
        %v1041 = vunpack.c.l.b16 %v480
        %v1042 = vunpack.c.h.b16 %v480
        %v1043 = vunpack.c.l.b16 %v481
        %v1044 = vunpack.c.h.b16 %v481
        %v1045 = vunpack.c.l.b16 %v482
        %v1046 = vunpack.c.h.b16 %v482
        %v1047 = vunpack.c.l.b16 %v483
        %v1048 = vunpack.c.l.b16 %v484
        %v1049 = vunpack.c.h.b16 %v484
        %v1050 = vunpack.c.l.b16 %v485
        %v1051 = vunpack.c.h.b16 %v485
        %v1052 = vunpack.c.l.b16 %v486
        %v1053 = vunpack.c.h.b16 %v486
        %v1054 = vunpack.c.l.b16 %v487
        %v1055 = vunpack.c.l.b16 %v488
        %v1056 = vunpack.c.h.b16 %v488
        %v1057 = vunpack.c.l.b16 %v489
        %v1058 = vunpack.c.h.b16 %v489
        %v1059 = vunpack.c.l.b16 %v490
        %v1060 = vunpack.c.h.b16 %v490
        %v1061 = vunpack.c.l.b16 %v491
        %v1062 = vunpack.c.l.b16 %v492
        %v1063 = vunpack.c.h.b16 %v492
        %v1064 = vunpack.c.l.b16 %v493
        %v1065 = vunpack.c.h.b16 %v493
        %v1066 = vunpack.c.l.b16 %v494
        %v1067 = vunpack.c.h.b16 %v494
        %v1068 = vunpack.c.l.b16 %v495
        %v1069 = vunpack.c.l.b16 %v496
        %v1070 = vunpack.c.h.b16 %v496
        %v1071 = vunpack.c.l.b16 %v497
        %v1072 = vunpack.c.h.b16 %v497
        %v1073 = vunpack.c.l.b16 %v498
        %v1074 = vunpack.c.h.b16 %v498
        %v1075 = vunpack.c.l.b16 %v499
        %v1076 = vunpack.c.l.b16 %v500
        %v1077 = vunpack.c.h.b16 %v500
        %v1078 = vunpack.c.l.b16 %v501
        %v1079 = vunpack.c.h.b16 %v501
        %v1080 = vunpack.c.l.b16 %v502
        %v1081 = vunpack.c.h.b16 %v502
        %v1082 = vunpack.c.l.b16 %v503
        %v1083 = vunpack.c.l.b16 %v504
        %v1084 = vunpack.c.h.b16 %v504
        %v1085 = vunpack.c.l.b16 %v505
        %v1086 = vunpack.c.h.b16 %v505
        %v1087 = vunpack.c.l.b16 %v506
        %v1088 = vunpack.c.h.b16 %v506
        %v1089 = vunpack.c.l.b16 %v507
        %v1090 = vunpack.c.l.b16 %v508
        %v1091 = vunpack.c.h.b16 %v508
        %v1092 = vunpack.c.l.b16 %v509
        %v1093 = vunpack.c.h.b16 %v509
        %v1094 = vunpack.c.l.b16 %v510
        %v1095 = vunpack.c.h.b16 %v510
        %v1096 = vunpack.c.l.b16 %v511
        %v1097 = vunpack.c.l.b16 %v512
        %v1098 = vunpack.c.h.b16 %v512
        %v1099 = vunpack.c.l.b16 %v513
        %v1100 = vunpack.c.h.b16 %v513
        %v1101 = vunpack.c.l.b16 %v514
        %v1102 = vunpack.c.h.b16 %v514
        %v1103 = vunpack.c.l.b16 %v515
        %v1104 = vunpack.c.l.b16 %v516
        %v1105 = vunpack.c.h.b16 %v516
        %v1106 = vunpack.c.l.b16 %v517
        %v1107 = vunpack.c.h.b16 %v517
        %v1108 = vunpack.c.l.b16 %v518
        %v1109 = vunpack.c.h.b16 %v518
        %v1110 = vunpack.c.l.b16 %v519
        %v1111 = vunpack.c.l.b16 %v520
        %v1112 = vunpack.c.h.b16 %v520
        %v1113 = vunpack.c.l.b16 %v521
        %v1114 = vunpack.c.h.b16 %v521
        %v1115 = vunpack.c.l.b16 %v522
        %v1116 = vunpack.c.h.b16 %v522
        %v1117 = vunpack.c.l.b16 %v523
        %v1118 = vunpack.c.l.b16 %v524
        %v1119 = vunpack.c.h.b16 %v524
        %v1120 = vunpack.c.l.b16 %v525
        %v1121 = vunpack.c.h.b16 %v525
        %v1122 = vunpack.c.l.b16 %v526
        %v1123 = vunpack.c.h.b16 %v526
        %v1124 = vunpack.c.l.b16 %v527
        %v1125 = vunpack.c.l.b16 %v528
        %v1126 = vunpack.c.h.b16 %v528
        %v1127 = vunpack.c.l.b16 %v529
        %v1128 = vunpack.c.h.b16 %v529
        %v1129 = vunpack.c.l.b16 %v530
        %v1130 = vunpack.c.h.b16 %v530
        %v1131 = vunpack.c.l.b16 %v531
        %v1132 = vunpack.c.l.b16 %v532
        %v1133 = vunpack.c.h.b16 %v532
        %v1134 = vunpack.c.l.b16 %v533
        %v1135 = vunpack.c.h.b16 %v533
        %v1136 = vunpack.c.l.b16 %v534
        %v1137 = vunpack.c.h.b16 %v534
        %v1138 = vunpack.c.l.b16 %v535
        %v1139 = vunpack.c.l.b16 %v536
        %v1140 = vunpack.c.h.b16 %v536
        %v1141 = vunpack.c.l.b16 %v537
        %v1142 = vunpack.c.h.b16 %v537
        %v1143 = vunpack.c.l.b16 %v538
        %v1144 = vunpack.c.h.b16 %v538
        %v1145 = vunpack.c.l.b16 %v539
        %v1146 = vunpack.c.l.b16 %v540
        %v1147 = vunpack.c.h.b16 %v540
        %v1148 = vunpack.c.l.b16 %v541
        %v1149 = vunpack.c.h.b16 %v541
        %v1150 = vunpack.c.l.b16 %v542
        %v1151 = vunpack.c.h.b16 %v542
        %v1152 = vunpack.c.l.b16 %v543
        %v1153 = vunpack.c.l.b16 %v544
        %v1154 = vunpack.c.h.b16 %v544
        %v1155 = vunpack.c.l.b16 %v545
        %v1156 = vunpack.c.h.b16 %v545
        %v1157 = vunpack.c.l.b16 %v546
        %v1158 = vunpack.c.h.b16 %v546
        %v1159 = vunpack.c.l.b16 %v547
        %v1160 = vunpack.c.l.b16 %v548
        %v1161 = vunpack.c.h.b16 %v548
        %v1162 = vunpack.c.l.b16 %v549
        %v1163 = vunpack.c.h.b16 %v549
        %v1164 = vunpack.c.l.b16 %v550
        %v1165 = vunpack.c.h.b16 %v550
        %v1166 = vunpack.c.l.b16 %v551
        %v1167 = vunpack.c.l.b16 %v552
        %v1168 = vunpack.c.h.b16 %v552
        %v1169 = vunpack.c.l.b16 %v553
        %v1170 = vunpack.c.h.b16 %v553
        %v1171 = vunpack.c.l.b16 %v554
        %v1172 = vunpack.c.h.b16 %v554
        %v1173 = vunpack.c.l.b16 %v555
        %v1174 = vunpack.c.l.b16 %v556
        %v1175 = vunpack.c.h.b16 %v556
        %v1176 = vunpack.c.l.b16 %v557
        %v1177 = vunpack.c.h.b16 %v557
        %v1178 = vunpack.c.l.b16 %v558
        %v1179 = vunpack.c.h.b16 %v558
        %v1180 = vunpack.c.l.b16 %v559
        %v1181 = vunpack.c.l.b16 %v560
        %v1182 = vunpack.c.h.b16 %v560
        %v1183 = vunpack.c.l.b16 %v561
        %v1184 = vunpack.c.h.b16 %v561
        %v1185 = vunpack.c.l.b16 %v562
        %v1186 = vunpack.c.h.b16 %v562
        %v1187 = vunpack.c.l.b16 %v563
        %v1188 = vunpack.c.l.b16 %v564
        %v1189 = vunpack.c.h.b16 %v564
        %v1190 = vunpack.c.l.b16 %v565
        %v1191 = vunpack.c.h.b16 %v565
        %v1192 = vunpack.c.l.b16 %v566
        %v1193 = vunpack.c.h.b16 %v566
        %v1194 = vunpack.c.l.b16 %v567
        %v1195 = vunpack.c.l.b16 %v568
        %v1196 = vunpack.c.h.b16 %v568
        %v1197 = vunpack.c.l.b16 %v569
        %v1198 = vunpack.c.h.b16 %v569
        %v1199 = vunpack.c.l.b16 %v570
        %v1200 = vunpack.c.h.b16 %v570
        %v1201 = vunpack.c.l.b16 %v571
        %v1202 = vunpack.c.l.b16 %v572
        %v1203 = vunpack.c.h.b16 %v572
        %v1204 = vunpack.c.l.b16 %v573
        %v1205 = vunpack.c.h.b16 %v573
        %v1206 = vunpack.c.l.b16 %v574
        %v1207 = vunpack.c.h.b16 %v574
        %v1208 = vunpack.c.l.b16 %v575
        %v1209 = vunpack.c.l.b16 %v576
        %v1210 = vunpack.c.h.b16 %v576
        %v1211 = vunpack.c.l.b16 %v577
        %v1212 = vunpack.c.h.b16 %v577
        %v1213 = vunpack.c.l.b16 %v578
        %v1214 = vunpack.c.h.b16 %v578
        %v1215 = vunpack.c.l.b16 %v579
        %v1216 = vunpack.c.l.b16 %v580
        %v1217 = vunpack.c.h.b16 %v580
        %v1218 = vunpack.c.l.b16 %v581
        %v1219 = vunpack.c.h.b16 %v581
        %v1220 = vunpack.c.l.b16 %v582
        %v1221 = vunpack.c.h.b16 %v582
        %v1222 = vunpack.c.l.b16 %v583
        %v1223 = vunpack.c.l.b16 %v584
        %v1224 = vunpack.c.h.b16 %v584
        %v1225 = vunpack.c.l.b16 %v585
        %v1226 = vunpack.c.h.b16 %v585
        %v1227 = vunpack.c.l.b16 %v586
        %v1228 = vunpack.c.h.b16 %v586
        %v1229 = vunpack.c.l.b16 %v587
        %v1230 = vunpack.c.l.b16 %v588
        %v1231 = vunpack.c.h.b16 %v588
        %v1232 = vunpack.c.l.b16 %v589
        %v1233 = vunpack.c.h.b16 %v589
        %v1234 = vunpack.c.l.b16 %v590
        %v1235 = vunpack.c.h.b16 %v590
        %v1236 = vunpack.c.l.b16 %v591
        %v1237 = vunpack.c.l.b16 %v592
        %v1238 = vunpack.c.h.b16 %v592
        %v1239 = vunpack.c.l.b16 %v593
        %v1240 = vunpack.c.h.b16 %v593
        %v1241 = vunpack.c.l.b16 %v594
        %v1242 = vunpack.c.h.b16 %v594
        %v1243 = vunpack.c.l.b16 %v595
        %v1244 = vunpack.c.l.b16 %v596
        %v1245 = vunpack.c.h.b16 %v596
        %v1246 = vunpack.c.l.b16 %v597
        %v1247 = vunpack.c.h.b16 %v597
        %v1248 = vunpack.c.l.b16 %v598
        %v1249 = vunpack.c.h.b16 %v598
        %v1250 = vunpack.c.l.b16 %v599
        %v1251 = vunpack.c.l.b16 %v600
        %v1252 = vunpack.c.h.b16 %v600
        %v1253 = vunpack.c.l.b16 %v601
        %v1254 = vunpack.c.h.b16 %v601
        %v1255 = vunpack.c.l.b16 %v602
        %v1256 = vunpack.c.h.b16 %v602
        %v1257 = vunpack.c.l.b16 %v603
        %v1258 = vunpack.c.l.b16 %v604
        %v1259 = vunpack.c.h.b16 %v604
        %v1260 = vunpack.c.l.b16 %v605
        %v1261 = vunpack.c.h.b16 %v605
        %v1262 = vunpack.c.l.b16 %v606
        %v1263 = vunpack.c.h.b16 %v606
        %v1264 = vunpack.c.l.b16 %v607
        %v1265 = vunpack.c.l.b16 %v608
        %v1266 = vunpack.c.h.b16 %v608
        %v1267 = vunpack.c.l.b16 %v609
        %v1268 = vunpack.c.h.b16 %v609
        %v1269 = vunpack.c.l.b16 %v610
        %v1270 = vunpack.c.h.b16 %v610
        %v1271 = vunpack.c.l.b16 %v611
        %v1272 = vunpack.c.l.b16 %v612
        %v1273 = vunpack.c.h.b16 %v612
        %v1274 = vunpack.c.l.b16 %v613
        %v1275 = vunpack.c.h.b16 %v613
        %v1276 = vunpack.c.l.b16 %v614
        %v1277 = vunpack.c.h.b16 %v614
        %v1278 = vunpack.c.l.b16 %v615
        %v1279 = vunpack.c.l.b16 %v616
        %v1280 = vunpack.c.h.b16 %v616
        %v1281 = vunpack.c.l.b16 %v617
        %v1282 = vunpack.c.h.b16 %v617
        %v1283 = vunpack.c.l.b16 %v618
        %v1284 = vunpack.c.h.b16 %v618
        %v1285 = vunpack.c.l.b16 %v619
        %v1286 = vunpack.c.l.b16 %v620
        %v1287 = vunpack.c.h.b16 %v620
        %v1288 = vunpack.c.l.b16 %v621
        %v1289 = vunpack.c.h.b16 %v621
        %v1290 = vunpack.c.l.b16 %v622
        %v1291 = vunpack.c.h.b16 %v622
        %v1292 = vunpack.c.l.b16 %v623
        %v1293 = vunpack.c.l.b16 %v624
        %v1294 = vunpack.c.h.b16 %v624
        %v1295 = vunpack.c.l.b16 %v625
        %v1296 = vunpack.c.h.b16 %v625
        %v1297 = vunpack.c.l.b16 %v626
        %v1298 = vunpack.c.h.b16 %v626
        %v1299 = vunpack.c.l.b16 %v627
        %v1300 = vunpack.c.l.b16 %v628
        %v1301 = vunpack.c.h.b16 %v628
        %v1302 = vunpack.c.l.b16 %v629
        %v1303 = vunpack.c.h.b16 %v629
        %v1304 = vunpack.c.l.b16 %v630
        %v1305 = vunpack.c.h.b16 %v630
        %v1306 = vunpack.c.l.b16 %v631
        %v1307 = vunpack.c.l.b16 %v632
        %v1308 = vunpack.c.h.b16 %v632
        %v1309 = vunpack.c.l.b16 %v633
        %v1310 = vunpack.c.h.b16 %v633
        %v1311 = vunpack.c.l.b16 %v634
        %v1312 = vunpack.c.h.b16 %v634
        %v1313 = vunpack.c.l.b16 %v635
        %v1314 = vunpack.c.l.b16 %v636
        %v1315 = vunpack.c.h.b16 %v636
        %v1316 = vunpack.c.l.b16 %v637
        %v1317 = vunpack.c.h.b16 %v637
        %v1318 = vunpack.c.l.b16 %v638
        %v1319 = vunpack.c.h.b16 %v638
        %v1320 = vunpack.c.l.b16 %v639
        %v1321 = vunpack.c.l.b16 %v640
        %v1322 = vunpack.c.h.b16 %v640
        %v1323 = vunpack.c.l.b16 %v641
        %v1324 = vunpack.c.h.b16 %v641
        %v1325 = vunpack.c.l.b16 %v642
        %v1326 = vunpack.c.h.b16 %v642
        %v1327 = vunpack.c.l.b16 %v643
        %v1328 = vunpack.c.l.b16 %v644
        %v1329 = vunpack.c.h.b16 %v644
        %v1330 = vunpack.c.l.b16 %v645
        %v1331 = vunpack.c.h.b16 %v645
        %v1332 = vunpack.c.l.b16 %v646
        %v1333 = vunpack.c.h.b16 %v646
        %v1334 = vunpack.c.l.b16 %v647
        %v1335 = vunpack.c.l.b16 %v648
        %v1336 = vunpack.c.h.b16 %v648
        %v1337 = vunpack.c.l.b16 %v649
        %v1338 = vunpack.c.h.b16 %v649
        %v1339 = vunpack.c.l.b16 %v650
        %v1340 = vunpack.c.h.b16 %v650
        %v1341 = vunpack.c.l.b16 %v651
        %v1342 = vunpack.c.l.b16 %v652
        %v1343 = vunpack.c.h.b16 %v652
        %v1344 = vunpack.c.l.b16 %v653
        %v1345 = vunpack.c.h.b16 %v653
        %v1346 = vunpack.c.l.b16 %v654
        %v1347 = vunpack.c.h.b16 %v654
        %v1348 = vunpack.c.l.b16 %v655
        %v1349 = vunpack.c.l.b16 %v656
        %v1350 = vunpack.c.h.b16 %v656
        %v1351 = vunpack.c.l.b16 %v657
        %v1352 = vunpack.c.h.b16 %v657
        %v1353 = vunpack.c.l.b16 %v658
        %v1354 = vunpack.c.h.b16 %v658
        %v1355 = vunpack.c.l.b16 %v659
        %v1356 = vunpack.c.l.b16 %v660
        %v1357 = vunpack.c.h.b16 %v660
        %v1358 = vunpack.c.l.b16 %v661
        %v1359 = vunpack.c.h.b16 %v661
        %v1360 = vunpack.c.l.b16 %v662
        %v1361 = vunpack.c.h.b16 %v662
        %v1362 = vunpack.c.l.b16 %v663
        %v1363 = vunpack.c.l.b16 %v664
        %v1364 = vunpack.c.h.b16 %v664
        %v1365 = vunpack.c.l.b16 %v665
        %v1366 = vunpack.c.h.b16 %v665
        %v1367 = vunpack.c.l.b16 %v666
        %v1368 = vunpack.c.h.b16 %v666
        %v1369 = vunpack.c.l.b16 %v667
        %v1370 = vunpack.c.l.b16 %v668
        %v1371 = vunpack.c.h.b16 %v668
        %v1372 = vunpack.c.l.b16 %v669
        %v1373 = vunpack.c.h.b16 %v669
        %v1374 = vunpack.c.l.b16 %v670
        %v1375 = vunpack.c.h.b16 %v670
        %v1376 = vunpack.c.l.b16 %v671
        %v1377 = vunpack.c.l.b16 %v672
        %v1378 = vunpack.c.h.b16 %v672
        %v1379 = vunpack.c.l.b16 %v673
        %v1380 = vunpack.c.h.b16 %v673
        %v1381 = vunpack.c.l.b16 %v674
        %v1382 = vunpack.c.h.b16 %v674
        %v1383 = vunpack.c.l.b16 %v675
        %v1384 = vunpack.c.l.b16 %v676
        %v1385 = vunpack.c.h.b16 %v676
        %v1386 = vunpack.c.l.b16 %v677
        %v1387 = vunpack.c.h.b16 %v677
        %v1388 = vunpack.c.l.b16 %v678
        %v1389 = vunpack.c.h.b16 %v678
        %v1390 = vunpack.c.l.b16 %v679
        %v1391 = vunpack.c.l.b16 %v680
        %v1392 = vunpack.c.h.b16 %v680
        %v1393 = vunpack.c.l.b16 %v681
        %v1394 = vunpack.c.h.b16 %v681
        %v1395 = vunpack.c.l.b16 %v682
        %v1396 = vunpack.c.h.b16 %v682
        %v1397 = vunpack.c.l.b16 %v683
        %v1398 = vunpack.c.l.b16 %v684
        %v1399 = vunpack.c.h.b16 %v684
        %v1400 = vunpack.c.l.b16 %v685
        %v1401 = vunpack.c.h.b16 %v685
        %v1402 = vunpack.c.l.b16 %v686
        %v1403 = vunpack.c.h.b16 %v686
        %v1404 = vunpack.c.l.b16 %v687
        %v1405 = vunpack.c.l.b16 %v688
        %v1406 = vunpack.c.h.b16 %v688
        %v1407 = vunpack.c.l.b16 %v689
        %v1408 = vunpack.c.h.b16 %v689
        %v1409 = vunpack.c.l.b16 %v690
        %v1410 = vunpack.c.h.b16 %v690
        %v1411 = vunpack.c.l.b16 %v691
        %v1412 = vunpack.c.l.b16 %v692
        %v1413 = vunpack.c.h.b16 %v692
        %v1414 = vunpack.c.l.b16 %v693
        %v1415 = vunpack.c.h.b16 %v693
        %v1416 = vunpack.c.l.b16 %v694
        %v1417 = vunpack.c.h.b16 %v694
        %v1418 = vunpack.c.l.b16 %v695
        %v1419 = vunpack.c.l.b16 %v696
        %v1420 = vunpack.c.h.b16 %v696
        %v1421 = vunpack.c.l.b16 %v697
        %v1422 = vunpack.c.h.b16 %v697
        %v1423 = vunpack.c.l.b16 %v698
        %v1424 = vunpack.c.h.b16 %v698
        %v1425 = vunpack.c.l.b16 %v699
        %v1426 = vunpack.c.l.b16 %v700
        %v1427 = vunpack.c.h.b16 %v700
        %v1428 = vunpack.c.l.b16 %v701
        %v1429 = vunpack.c.h.b16 %v701
        %v1430 = vunpack.c.l.b16 %v702
        %v1431 = vunpack.c.h.b16 %v702
        %v1432 = vunpack.c.l.b16 %v703
        %v1433 = vunpack.c.l.b16 %v704
        %v1434 = vunpack.c.h.b16 %v704
        %v1435 = vunpack.c.l.b16 %v705
        %v1436 = vunpack.c.h.b16 %v705
        %v1437 = vunpack.c.l.b16 %v706
        %v1438 = vunpack.c.h.b16 %v706
        %v1439 = vunpack.c.l.b16 %v707
        %v1440 = vunpack.c.l.b16 %v708
        %v1441 = vunpack.c.h.b16 %v708
        %v1442 = vunpack.c.l.b16 %v709
        %v1443 = vunpack.c.h.b16 %v709
        %v1444 = vunpack.c.l.b16 %v710
        %v1445 = vunpack.c.h.b16 %v710
        %v1446 = vunpack.c.l.b16 %v711
        %v1447 = vunpack.c.l.b16 %v712
        %v1448 = vunpack.c.h.b16 %v712
        %v1449 = vunpack.c.l.b16 %v713
        %v1450 = vunpack.c.h.b16 %v713
        %v1451 = vunpack.c.l.b16 %v714
        %v1452 = vunpack.c.h.b16 %v714
        %v1453 = vunpack.c.l.b16 %v715
        %v1454 = vunpack.c.l.b16 %v716
        %v1455 = vunpack.c.h.b16 %v716
        %v1456 = vunpack.c.l.b16 %v717
        %v1457 = vunpack.c.h.b16 %v717
        %v1458 = vunpack.c.l.b16 %v718
        %v1459 = vunpack.c.h.b16 %v718
        %v1460 = vunpack.c.l.b16 %v719
        %v1461 = vpack.c.b16 %v1020, %v1013
        %v1462 = vpack.c.b16 %v1021, %v1014
        %v1463 = vpack.c.b16 %v1022, %v1015
        %v1464 = vpack.c.b16 %v1023, %v1016
        %v1465 = vpack.c.b16 %v1024, %v1017
        %v1466 = vpack.c.b16 %v1025, %v1018
        %v1467 = vpack.c.b16 %v1026, %v1019
        %v1468 = vpack.c.b16 %v1034, %v1027
        %v1469 = vpack.c.b16 %v1035, %v1028
        %v1470 = vpack.c.b16 %v1036, %v1029
        %v1471 = vpack.c.b16 %v1037, %v1030
        %v1472 = vpack.c.b16 %v1038, %v1031
        %v1473 = vpack.c.b16 %v1039, %v1032
        %v1474 = vpack.c.b16 %v1040, %v1033
        %v1475 = vpack.c.b16 %v1048, %v1041
        %v1476 = vpack.c.b16 %v1049, %v1042
        %v1477 = vpack.c.b16 %v1050, %v1043
        %v1478 = vpack.c.b16 %v1051, %v1044
        %v1479 = vpack.c.b16 %v1052, %v1045
        %v1480 = vpack.c.b16 %v1053, %v1046
        %v1481 = vpack.c.b16 %v1054, %v1047
        %v1482 = vpack.c.b16 %v1062, %v1055
        %v1483 = vpack.c.b16 %v1063, %v1056
        %v1484 = vpack.c.b16 %v1064, %v1057
        %v1485 = vpack.c.b16 %v1065, %v1058
        %v1486 = vpack.c.b16 %v1066, %v1059
        %v1487 = vpack.c.b16 %v1067, %v1060
        %v1488 = vpack.c.b16 %v1068, %v1061
        %v1489 = vpack.c.b16 %v1076, %v1069
        %v1490 = vpack.c.b16 %v1077, %v1070
        %v1491 = vpack.c.b16 %v1078, %v1071
        %v1492 = vpack.c.b16 %v1079, %v1072
        %v1493 = vpack.c.b16 %v1080, %v1073
        %v1494 = vpack.c.b16 %v1081, %v1074
        %v1495 = vpack.c.b16 %v1082, %v1075
        %v1496 = vpack.c.b16 %v1090, %v1083
        %v1497 = vpack.c.b16 %v1091, %v1084
        %v1498 = vpack.c.b16 %v1092, %v1085
        %v1499 = vpack.c.b16 %v1093, %v1086
        %v1500 = vpack.c.b16 %v1094, %v1087
        %v1501 = vpack.c.b16 %v1095, %v1088
        %v1502 = vpack.c.b16 %v1096, %v1089
        %v1503 = vpack.c.b16 %v1104, %v1097
        %v1504 = vpack.c.b16 %v1105, %v1098
        %v1505 = vpack.c.b16 %v1106, %v1099
        %v1506 = vpack.c.b16 %v1107, %v1100
        %v1507 = vpack.c.b16 %v1108, %v1101
        %v1508 = vpack.c.b16 %v1109, %v1102
        %v1509 = vpack.c.b16 %v1110, %v1103
        %v1510 = vpack.c.b16 %v1118, %v1111
        %v1511 = vpack.c.b16 %v1119, %v1112
        %v1512 = vpack.c.b16 %v1120, %v1113
        %v1513 = vpack.c.b16 %v1121, %v1114
        %v1514 = vpack.c.b16 %v1122, %v1115
        %v1515 = vpack.c.b16 %v1123, %v1116
        %v1516 = vpack.c.b16 %v1124, %v1117
        %v1517 = vpack.c.b16 %v1132, %v1125
        %v1518 = vpack.c.b16 %v1133, %v1126
        %v1519 = vpack.c.b16 %v1134, %v1127
        %v1520 = vpack.c.b16 %v1135, %v1128
        %v1521 = vpack.c.b16 %v1136, %v1129
        %v1522 = vpack.c.b16 %v1137, %v1130
        %v1523 = vpack.c.b16 %v1138, %v1131
        %v1524 = vpack.c.b16 %v1146, %v1139
        %v1525 = vpack.c.b16 %v1147, %v1140
        %v1526 = vpack.c.b16 %v1148, %v1141
        %v1527 = vpack.c.b16 %v1149, %v1142
        %v1528 = vpack.c.b16 %v1150, %v1143
        %v1529 = vpack.c.b16 %v1151, %v1144
        %v1530 = vpack.c.b16 %v1152, %v1145
        %v1531 = vpack.c.b16 %v1160, %v1153
        %v1532 = vpack.c.b16 %v1161, %v1154
        %v1533 = vpack.c.b16 %v1162, %v1155
        %v1534 = vpack.c.b16 %v1163, %v1156
        %v1535 = vpack.c.b16 %v1164, %v1157
        %v1536 = vpack.c.b16 %v1165, %v1158
        %v1537 = vpack.c.b16 %v1166, %v1159
        %v1538 = vpack.c.b16 %v1174, %v1167
        %v1539 = vpack.c.b16 %v1175, %v1168
        %v1540 = vpack.c.b16 %v1176, %v1169
        %v1541 = vpack.c.b16 %v1177, %v1170
        %v1542 = vpack.c.b16 %v1178, %v1171
        %v1543 = vpack.c.b16 %v1179, %v1172
        %v1544 = vpack.c.b16 %v1180, %v1173
        %v1545 = vpack.c.b16 %v1188, %v1181
        %v1546 = vpack.c.b16 %v1189, %v1182
        %v1547 = vpack.c.b16 %v1190, %v1183
        %v1548 = vpack.c.b16 %v1191, %v1184
        %v1549 = vpack.c.b16 %v1192, %v1185
        %v1550 = vpack.c.b16 %v1193, %v1186
        %v1551 = vpack.c.b16 %v1194, %v1187
        %v1552 = vpack.c.b16 %v1202, %v1195
        %v1553 = vpack.c.b16 %v1203, %v1196
        %v1554 = vpack.c.b16 %v1204, %v1197
        %v1555 = vpack.c.b16 %v1205, %v1198
        %v1556 = vpack.c.b16 %v1206, %v1199
        %v1557 = vpack.c.b16 %v1207, %v1200
        %v1558 = vpack.c.b16 %v1208, %v1201
        %v1559 = vpack.c.b16 %v1216, %v1209
        %v1560 = vpack.c.b16 %v1217, %v1210
        %v1561 = vpack.c.b16 %v1218, %v1211
        %v1562 = vpack.c.b16 %v1219, %v1212
        %v1563 = vpack.c.b16 %v1220, %v1213
        %v1564 = vpack.c.b16 %v1221, %v1214
        %v1565 = vpack.c.b16 %v1222, %v1215
        %v1566 = vpack.c.b16 %v1230, %v1223
        %v1567 = vpack.c.b16 %v1231, %v1224
        %v1568 = vpack.c.b16 %v1232, %v1225
        %v1569 = vpack.c.b16 %v1233, %v1226
        %v1570 = vpack.c.b16 %v1234, %v1227
        %v1571 = vpack.c.b16 %v1235, %v1228
        %v1572 = vpack.c.b16 %v1236, %v1229
        %v1573 = vpack.c.b16 %v1244, %v1237
        %v1574 = vpack.c.b16 %v1245, %v1238
        %v1575 = vpack.c.b16 %v1246, %v1239
        %v1576 = vpack.c.b16 %v1247, %v1240
        %v1577 = vpack.c.b16 %v1248, %v1241
        %v1578 = vpack.c.b16 %v1249, %v1242
        %v1579 = vpack.c.b16 %v1250, %v1243
        %v1580 = vpack.c.b16 %v1258, %v1251
        %v1581 = vpack.c.b16 %v1259, %v1252
        %v1582 = vpack.c.b16 %v1260, %v1253
        %v1583 = vpack.c.b16 %v1261, %v1254
        %v1584 = vpack.c.b16 %v1262, %v1255
        %v1585 = vpack.c.b16 %v1263, %v1256
        %v1586 = vpack.c.b16 %v1264, %v1257
        %v1587 = vpack.c.b16 %v1272, %v1265
        %v1588 = vpack.c.b16 %v1273, %v1266
        %v1589 = vpack.c.b16 %v1274, %v1267
        %v1590 = vpack.c.b16 %v1275, %v1268
        %v1591 = vpack.c.b16 %v1276, %v1269
        %v1592 = vpack.c.b16 %v1277, %v1270
        %v1593 = vpack.c.b16 %v1278, %v1271
        %v1594 = vpack.c.b16 %v1286, %v1279
        %v1595 = vpack.c.b16 %v1287, %v1280
        %v1596 = vpack.c.b16 %v1288, %v1281
        %v1597 = vpack.c.b16 %v1289, %v1282
        %v1598 = vpack.c.b16 %v1290, %v1283
        %v1599 = vpack.c.b16 %v1291, %v1284
        %v1600 = vpack.c.b16 %v1292, %v1285
        %v1601 = vpack.c.b16 %v1300, %v1293
        %v1602 = vpack.c.b16 %v1301, %v1294
        %v1603 = vpack.c.b16 %v1302, %v1295
        %v1604 = vpack.c.b16 %v1303, %v1296
        %v1605 = vpack.c.b16 %v1304, %v1297
        %v1606 = vpack.c.b16 %v1305, %v1298
        %v1607 = vpack.c.b16 %v1306, %v1299
        %v1608 = vpack.c.b16 %v1314, %v1307
        %v1609 = vpack.c.b16 %v1315, %v1308
        %v1610 = vpack.c.b16 %v1316, %v1309
        %v1611 = vpack.c.b16 %v1317, %v1310
        %v1612 = vpack.c.b16 %v1318, %v1311
        %v1613 = vpack.c.b16 %v1319, %v1312
        %v1614 = vpack.c.b16 %v1320, %v1313
        %v1615 = vpack.c.b16 %v1328, %v1321
        %v1616 = vpack.c.b16 %v1329, %v1322
        %v1617 = vpack.c.b16 %v1330, %v1323
        %v1618 = vpack.c.b16 %v1331, %v1324
        %v1619 = vpack.c.b16 %v1332, %v1325
        %v1620 = vpack.c.b16 %v1333, %v1326
        %v1621 = vpack.c.b16 %v1334, %v1327
        %v1622 = vpack.c.b16 %v1342, %v1335
        %v1623 = vpack.c.b16 %v1343, %v1336
        %v1624 = vpack.c.b16 %v1344, %v1337
        %v1625 = vpack.c.b16 %v1345, %v1338
        %v1626 = vpack.c.b16 %v1346, %v1339
        %v1627 = vpack.c.b16 %v1347, %v1340
        %v1628 = vpack.c.b16 %v1348, %v1341
        %v1629 = vpack.c.b16 %v1356, %v1349
        %v1630 = vpack.c.b16 %v1357, %v1350
        %v1631 = vpack.c.b16 %v1358, %v1351
        %v1632 = vpack.c.b16 %v1359, %v1352
        %v1633 = vpack.c.b16 %v1360, %v1353
        %v1634 = vpack.c.b16 %v1361, %v1354
        %v1635 = vpack.c.b16 %v1362, %v1355
        %v1636 = vpack.c.b16 %v1370, %v1363
        %v1637 = vpack.c.b16 %v1371, %v1364
        %v1638 = vpack.c.b16 %v1372, %v1365
        %v1639 = vpack.c.b16 %v1373, %v1366
        %v1640 = vpack.c.b16 %v1374, %v1367
        %v1641 = vpack.c.b16 %v1375, %v1368
        %v1642 = vpack.c.b16 %v1376, %v1369
        %v1643 = vpack.c.b16 %v1384, %v1377
        %v1644 = vpack.c.b16 %v1385, %v1378
        %v1645 = vpack.c.b16 %v1386, %v1379
        %v1646 = vpack.c.b16 %v1387, %v1380
        %v1647 = vpack.c.b16 %v1388, %v1381
        %v1648 = vpack.c.b16 %v1389, %v1382
        %v1649 = vpack.c.b16 %v1390, %v1383
        %v1650 = vpack.c.b16 %v1398, %v1391
        %v1651 = vpack.c.b16 %v1399, %v1392
        %v1652 = vpack.c.b16 %v1400, %v1393
        %v1653 = vpack.c.b16 %v1401, %v1394
        %v1654 = vpack.c.b16 %v1402, %v1395
        %v1655 = vpack.c.b16 %v1403, %v1396
        %v1656 = vpack.c.b16 %v1404, %v1397
        %v1657 = vpack.c.b16 %v1412, %v1405
        %v1658 = vpack.c.b16 %v1413, %v1406
        %v1659 = vpack.c.b16 %v1414, %v1407
        %v1660 = vpack.c.b16 %v1415, %v1408
        %v1661 = vpack.c.b16 %v1416, %v1409
        %v1662 = vpack.c.b16 %v1417, %v1410
        %v1663 = vpack.c.b16 %v1418, %v1411
        %v1664 = vpack.c.b16 %v1426, %v1419
        %v1665 = vpack.c.b16 %v1427, %v1420
        %v1666 = vpack.c.b16 %v1428, %v1421
        %v1667 = vpack.c.b16 %v1429, %v1422
        %v1668 = vpack.c.b16 %v1430, %v1423
        %v1669 = vpack.c.b16 %v1431, %v1424
        %v1670 = vpack.c.b16 %v1432, %v1425
        %v1671 = vpack.c.b16 %v1440, %v1433
        %v1672 = vpack.c.b16 %v1441, %v1434
        %v1673 = vpack.c.b16 %v1442, %v1435
        %v1674 = vpack.c.b16 %v1443, %v1436
        %v1675 = vpack.c.b16 %v1444, %v1437
        %v1676 = vpack.c.b16 %v1445, %v1438
        %v1677 = vpack.c.b16 %v1446, %v1439
        %v1678 = vpack.c.b16 %v1454, %v1447
        %v1679 = vpack.c.b16 %v1455, %v1448
        %v1680 = vpack.c.b16 %v1456, %v1449
        %v1681 = vpack.c.b16 %v1457, %v1450
        %v1682 = vpack.c.b16 %v1458, %v1451
        %v1683 = vpack.c.b16 %v1459, %v1452
        %v1684 = vpack.c.b16 %v1460, %v1453
        %1909 = vmatprep.subr.bf16.mxu0 %v1462
        %1910 = vmatpush1.bf16.msra.mxu0 %v1461
        %1911 = vmatprep.subr.bf16.mxu0 %v1469
        %1912 = vmatpush1.bf16.msra.mxu0 %v1468
        %1913 = vmatprep.subr.bf16.mxu0 %v1476
        %1914 = vmatpush1.bf16.msra.mxu0 %v1475
        %1915 = vmatprep.subr.bf16.mxu0 %v1483
        %1916 = vmatpush1.bf16.msra.mxu0 %v1482
        %1917 = vmatprep.subr.bf16.mxu0 %v1490
        %1918 = vmatpush1.bf16.msra.mxu0 %v1489
        %1919 = vmatprep.subr.bf16.mxu0 %v1497
        %1920 = vmatpush1.bf16.msra.mxu0 %v1496
        %1921 = vmatprep.subr.bf16.mxu0 %v1504
        %1922 = vmatpush1.bf16.msra.mxu0 %v1503
        %1923 = vmatprep.subr.bf16.mxu0 %v1511
        %1924 = vmatpush1.bf16.msra.mxu0 %v1510
        %1925 = vmatprep.subr.bf16.mxu0 %v1518
        %1926 = vmatpush1.bf16.msra.mxu0 %v1517
        %1927 = vmatprep.subr.bf16.mxu0 %v1525
        %1928 = vmatpush1.bf16.msra.mxu0 %v1524
        %1929 = vmatprep.subr.bf16.mxu0 %v1532
        %1930 = vmatpush1.bf16.msra.mxu0 %v1531
        %1931 = vmatprep.subr.bf16.mxu0 %v1539
        %1932 = vmatpush1.bf16.msra.mxu0 %v1538
        %1933 = vmatprep.subr.bf16.mxu0 %v1546
        %1934 = vmatpush1.bf16.msra.mxu0 %v1545
        %1935 = vmatprep.subr.bf16.mxu0 %v1553
        %1936 = vmatpush1.bf16.msra.mxu0 %v1552
        %1937 = vmatprep.subr.bf16.mxu0 %v1560
        %1938 = vmatpush1.bf16.msra.mxu0 %v1559
        %1939 = vmatprep.subr.bf16.mxu0 %v1567
        %1940 = vmatpush1.bf16.msra.mxu0 %v1566
        %1941 = vmatprep.mubr.bf16.mxu0 %v461
        %1942 = vmatmul.mubr.bf16.gmra.mrb[0].mxu0 %v460
        %v1943 = vpop.f32.mrb[0].mxu0
        %v1944 = vadd.f32 %v725, %v1943
        %v1945 = vpop.f32.mrb[0].mxu0
        %v1946 = vadd.f32 %v729, %v1945
        %v1947 = vpop.f32.mrb[0].mxu0
        %v1948 = vpop.f32.mrb[0].mxu0
        %1949 = vdwg.mxu0
        %1950 = vmatprep.subr.bf16.mxu0 %v1574
        %1951 = vmatpush1.bf16.msra.mxu0 %v1573
        %1952 = vmatprep.subr.bf16.mxu0 %v1581
        %1953 = vmatpush1.bf16.msra.mxu0 %v1580
        %1954 = vmatprep.subr.bf16.mxu0 %v1588
        %1955 = vmatpush1.bf16.msra.mxu0 %v1587
        %1956 = vmatprep.subr.bf16.mxu0 %v1595
        %1957 = vmatpush1.bf16.msra.mxu0 %v1594
        %1958 = vmatprep.subr.bf16.mxu0 %v1602
        %1959 = vmatpush1.bf16.msra.mxu0 %v1601
        %1960 = vmatprep.subr.bf16.mxu0 %v1609
        %1961 = vmatpush1.bf16.msra.mxu0 %v1608
        %1962 = vmatprep.subr.bf16.mxu0 %v1616
        %1963 = vmatpush1.bf16.msra.mxu0 %v1615
        %1964 = vmatprep.subr.bf16.mxu0 %v1623
        %1965 = vmatpush1.bf16.msra.mxu0 %v1622
        %1966 = vmatprep.subr.bf16.mxu0 %v1630
        %1967 = vmatpush1.bf16.msra.mxu0 %v1629
        %1968 = vmatprep.subr.bf16.mxu0 %v1637
        %1969 = vmatpush1.bf16.msra.mxu0 %v1636
        %1970 = vmatprep.subr.bf16.mxu0 %v1644
        %1971 = vmatpush1.bf16.msra.mxu0 %v1643
        %1972 = vmatprep.subr.bf16.mxu0 %v1651
        %1973 = vmatpush1.bf16.msra.mxu0 %v1650
        %1974 = vmatprep.subr.bf16.mxu0 %v1658
        %1975 = vmatpush1.bf16.msra.mxu0 %v1657
        %1976 = vmatprep.subr.bf16.mxu0 %v1665
        %1977 = vmatpush1.bf16.msra.mxu0 %v1664
        %1978 = vmatprep.subr.bf16.mxu0 %v1672
        %1979 = vmatpush1.bf16.msra.mxu0 %v1671
        %1980 = vmatprep.subr.bf16.mxu0 %v1679
        %1981 = vmatpush1.bf16.msra.mxu0 %v1678
        %1982 = vmatprep.mubr.bf16.mxu0 %v463
        %1983 = vmatmul.mubr.bf16.gmra.mrb[0].mxu0 %v462
        %v1984 = vpop.f32.mrb[0].mxu0
        %v1985 = vadd.f32 %v1944, %v1984
        %v1986 = vpop.f32.mrb[0].mxu0
        %v1987 = vadd.f32 %v1946, %v1986
        %v1988 = vpop.f32.mrb[0].mxu0
        %v1989 = vpop.f32.mrb[0].mxu0
        %1990 = vdwg.mxu0
        %1991 = vmatprep.subr.bf16.mxu0 %v1464
        %1992 = vmatpush1.bf16.msra.mxu0 %v1463
        %1993 = vmatprep.subr.bf16.mxu0 %v1471
        %1994 = vmatpush1.bf16.msra.mxu0 %v1470
        %1995 = vmatprep.subr.bf16.mxu0 %v1478
        %1996 = vmatpush1.bf16.msra.mxu0 %v1477
        %1997 = vmatprep.subr.bf16.mxu0 %v1485
        %1998 = vmatpush1.bf16.msra.mxu0 %v1484
        %1999 = vmatprep.subr.bf16.mxu0 %v1492
        %2000 = vmatpush1.bf16.msra.mxu0 %v1491
        %2001 = vmatprep.subr.bf16.mxu0 %v1499
        %2002 = vmatpush1.bf16.msra.mxu0 %v1498
        %2003 = vmatprep.subr.bf16.mxu0 %v1506
        %2004 = vmatpush1.bf16.msra.mxu0 %v1505
        %2005 = vmatprep.subr.bf16.mxu0 %v1513
        %2006 = vmatpush1.bf16.msra.mxu0 %v1512
        %2007 = vmatprep.subr.bf16.mxu0 %v1520
        %2008 = vmatpush1.bf16.msra.mxu0 %v1519
        %2009 = vmatprep.subr.bf16.mxu0 %v1527
        %2010 = vmatpush1.bf16.msra.mxu0 %v1526
        %2011 = vmatprep.subr.bf16.mxu0 %v1534
        %2012 = vmatpush1.bf16.msra.mxu0 %v1533
        %2013 = vmatprep.subr.bf16.mxu0 %v1541
        %2014 = vmatpush1.bf16.msra.mxu0 %v1540
        %2015 = vmatprep.subr.bf16.mxu0 %v1548
        %2016 = vmatpush1.bf16.msra.mxu0 %v1547
        %2017 = vmatprep.subr.bf16.mxu0 %v1555
        %2018 = vmatpush1.bf16.msra.mxu0 %v1554
        %2019 = vmatprep.subr.bf16.mxu0 %v1562
        %2020 = vmatpush1.bf16.msra.mxu0 %v1561
        %2021 = vmatprep.subr.bf16.mxu0 %v1569
        %2022 = vmatpush1.bf16.msra.mxu0 %v1568
        %2023 = vmatprep.mubr.bf16.mxu0 %v461
        %2024 = vmatmul.mubr.bf16.gmra.mrb[0].mxu0 %v460
        %v2025 = vpop.f32.mrb[0].mxu0
        %v2026 = vadd.f32 %v733, %v2025
        %v2027 = vpop.f32.mrb[0].mxu0
        %v2028 = vadd.f32 %v737, %v2027
        %v2029 = vpop.f32.mrb[0].mxu0
        %v2030 = vpop.f32.mrb[0].mxu0
        %2031 = vdwg.mxu0
        %2032 = vmatprep.subr.bf16.mxu0 %v1576
        %2033 = vmatpush1.bf16.msra.mxu0 %v1575
        %2034 = vmatprep.subr.bf16.mxu0 %v1583
        %2035 = vmatpush1.bf16.msra.mxu0 %v1582
        %2036 = vmatprep.subr.bf16.mxu0 %v1590
        %2037 = vmatpush1.bf16.msra.mxu0 %v1589
        %2038 = vmatprep.subr.bf16.mxu0 %v1597
        %2039 = vmatpush1.bf16.msra.mxu0 %v1596
        %2040 = vmatprep.subr.bf16.mxu0 %v1604
        %2041 = vmatpush1.bf16.msra.mxu0 %v1603
        %2042 = vmatprep.subr.bf16.mxu0 %v1611
        %2043 = vmatpush1.bf16.msra.mxu0 %v1610
        %2044 = vmatprep.subr.bf16.mxu0 %v1618
        %2045 = vmatpush1.bf16.msra.mxu0 %v1617
        %2046 = vmatprep.subr.bf16.mxu0 %v1625
        %2047 = vmatpush1.bf16.msra.mxu0 %v1624
        %2048 = vmatprep.subr.bf16.mxu0 %v1632
        %2049 = vmatpush1.bf16.msra.mxu0 %v1631
        %2050 = vmatprep.subr.bf16.mxu0 %v1639
        %2051 = vmatpush1.bf16.msra.mxu0 %v1638
        %2052 = vmatprep.subr.bf16.mxu0 %v1646
        %2053 = vmatpush1.bf16.msra.mxu0 %v1645
        %2054 = vmatprep.subr.bf16.mxu0 %v1653
        %2055 = vmatpush1.bf16.msra.mxu0 %v1652
        %2056 = vmatprep.subr.bf16.mxu0 %v1660
        %2057 = vmatpush1.bf16.msra.mxu0 %v1659
        %2058 = vmatprep.subr.bf16.mxu0 %v1667
        %2059 = vmatpush1.bf16.msra.mxu0 %v1666
        %2060 = vmatprep.subr.bf16.mxu0 %v1674
        %2061 = vmatpush1.bf16.msra.mxu0 %v1673
        %2062 = vmatprep.subr.bf16.mxu0 %v1681
        %2063 = vmatpush1.bf16.msra.mxu0 %v1680
        %2064 = vmatprep.mubr.bf16.mxu0 %v463
        %2065 = vmatmul.mubr.bf16.gmra.mrb[0].mxu0 %v462
        %v2066 = vpop.f32.mrb[0].mxu0
        %v2067 = vadd.f32 %v2026, %v2066
        %v2068 = vpop.f32.mrb[0].mxu0
        %v2069 = vadd.f32 %v2028, %v2068
        %v2070 = vpop.f32.mrb[0].mxu0
        %v2071 = vpop.f32.mrb[0].mxu0
        %2072 = vdwg.mxu0
        %2073 = vmatprep.subr.bf16.mxu0 %v1466
        %2074 = vmatpush1.bf16.msra.mxu0 %v1465
        %2075 = vmatprep.subr.bf16.mxu0 %v1473
        %2076 = vmatpush1.bf16.msra.mxu0 %v1472
        %2077 = vmatprep.subr.bf16.mxu0 %v1480
        %2078 = vmatpush1.bf16.msra.mxu0 %v1479
        %2079 = vmatprep.subr.bf16.mxu0 %v1487
        %2080 = vmatpush1.bf16.msra.mxu0 %v1486
        %2081 = vmatprep.subr.bf16.mxu0 %v1494
        %2082 = vmatpush1.bf16.msra.mxu0 %v1493
        %2083 = vmatprep.subr.bf16.mxu0 %v1501
        %2084 = vmatpush1.bf16.msra.mxu0 %v1500
        %2085 = vmatprep.subr.bf16.mxu0 %v1508
        %2086 = vmatpush1.bf16.msra.mxu0 %v1507
        %2087 = vmatprep.subr.bf16.mxu0 %v1515
        %2088 = vmatpush1.bf16.msra.mxu0 %v1514
        %2089 = vmatprep.subr.bf16.mxu0 %v1522
        %2090 = vmatpush1.bf16.msra.mxu0 %v1521
        %2091 = vmatprep.subr.bf16.mxu0 %v1529
        %2092 = vmatpush1.bf16.msra.mxu0 %v1528
        %2093 = vmatprep.subr.bf16.mxu0 %v1536
        %2094 = vmatpush1.bf16.msra.mxu0 %v1535
        %2095 = vmatprep.subr.bf16.mxu0 %v1543
        %2096 = vmatpush1.bf16.msra.mxu0 %v1542
        %2097 = vmatprep.subr.bf16.mxu0 %v1550
        %2098 = vmatpush1.bf16.msra.mxu0 %v1549
        %2099 = vmatprep.subr.bf16.mxu0 %v1557
        %2100 = vmatpush1.bf16.msra.mxu0 %v1556
        %2101 = vmatprep.subr.bf16.mxu0 %v1564
        %2102 = vmatpush1.bf16.msra.mxu0 %v1563
        %2103 = vmatprep.subr.bf16.mxu0 %v1571
        %2104 = vmatpush1.bf16.msra.mxu0 %v1570
        %2105 = vmatprep.mubr.bf16.mxu0 %v461
        %2106 = vmatmul.mubr.bf16.gmra.mrb[0].mxu0 %v460
        %v2107 = vpop.f32.mrb[0].mxu0
        %v2108 = vadd.f32 %v741, %v2107
        %v2109 = vpop.f32.mrb[0].mxu0
        %v2110 = vadd.f32 %v745, %v2109
        %v2111 = vpop.f32.mrb[0].mxu0
        %v2112 = vpop.f32.mrb[0].mxu0
        %2113 = vdwg.mxu0
        %2114 = vmatprep.subr.bf16.mxu0 %v1578
        %2115 = vmatpush1.bf16.msra.mxu0 %v1577
        %2116 = vmatprep.subr.bf16.mxu0 %v1585
        %2117 = vmatpush1.bf16.msra.mxu0 %v1584
        %2118 = vmatprep.subr.bf16.mxu0 %v1592
        %2119 = vmatpush1.bf16.msra.mxu0 %v1591
        %2120 = vmatprep.subr.bf16.mxu0 %v1599
        %2121 = vmatpush1.bf16.msra.mxu0 %v1598
        %2122 = vmatprep.subr.bf16.mxu0 %v1606
        %2123 = vmatpush1.bf16.msra.mxu0 %v1605
        %2124 = vmatprep.subr.bf16.mxu0 %v1613
        %2125 = vmatpush1.bf16.msra.mxu0 %v1612
        %2126 = vmatprep.subr.bf16.mxu0 %v1620
        %2127 = vmatpush1.bf16.msra.mxu0 %v1619
        %2128 = vmatprep.subr.bf16.mxu0 %v1627
        %2129 = vmatpush1.bf16.msra.mxu0 %v1626
        %2130 = vmatprep.subr.bf16.mxu0 %v1634
        %2131 = vmatpush1.bf16.msra.mxu0 %v1633
        %2132 = vmatprep.subr.bf16.mxu0 %v1641
        %2133 = vmatpush1.bf16.msra.mxu0 %v1640
        %2134 = vmatprep.subr.bf16.mxu0 %v1648
        %2135 = vmatpush1.bf16.msra.mxu0 %v1647
        %2136 = vmatprep.subr.bf16.mxu0 %v1655
        %2137 = vmatpush1.bf16.msra.mxu0 %v1654
        %2138 = vmatprep.subr.bf16.mxu0 %v1662
        %2139 = vmatpush1.bf16.msra.mxu0 %v1661
        %2140 = vmatprep.subr.bf16.mxu0 %v1669
        %2141 = vmatpush1.bf16.msra.mxu0 %v1668
        %2142 = vmatprep.subr.bf16.mxu0 %v1676
        %2143 = vmatpush1.bf16.msra.mxu0 %v1675
        %2144 = vmatprep.subr.bf16.mxu0 %v1683
        %2145 = vmatpush1.bf16.msra.mxu0 %v1682
        %2146 = vmatprep.mubr.bf16.mxu0 %v463
        %2147 = vmatmul.mubr.bf16.gmra.mrb[0].mxu0 %v462
        %v2148 = vpop.f32.mrb[0].mxu0
        %v2149 = vadd.f32 %v2108, %v2148
        %v2150 = vpop.f32.mrb[0].mxu0
        %v2151 = vadd.f32 %v2110, %v2150
        %v2152 = vpop.f32.mrb[0].mxu0
        %v2153 = vpop.f32.mrb[0].mxu0
        %2154 = vdwg.mxu0
        %2155 = vmatprep.subr.bf16.mxu0 0
        %2156 = vmatpush1.bf16.msra.mxu0 %v1467
        %2157 = vmatprep.subr.bf16.mxu0 0
        %2158 = vmatpush1.bf16.msra.mxu0 %v1474
        %2159 = vmatprep.subr.bf16.mxu0 0
        %2160 = vmatpush1.bf16.msra.mxu0 %v1481
        %2161 = vmatprep.subr.bf16.mxu0 0
        %2162 = vmatpush1.bf16.msra.mxu0 %v1488
        %2163 = vmatprep.subr.bf16.mxu0 0
        %2164 = vmatpush1.bf16.msra.mxu0 %v1495
        %2165 = vmatprep.subr.bf16.mxu0 0
        %2166 = vmatpush1.bf16.msra.mxu0 %v1502
        %2167 = vmatprep.subr.bf16.mxu0 0
        %2168 = vmatpush1.bf16.msra.mxu0 %v1509
        %2169 = vmatprep.subr.bf16.mxu0 0
        %2170 = vmatpush1.bf16.msra.mxu0 %v1516
        %2171 = vmatprep.subr.bf16.mxu0 0
        %2172 = vmatpush1.bf16.msra.mxu0 %v1523
        %2173 = vmatprep.subr.bf16.mxu0 0
        %2174 = vmatpush1.bf16.msra.mxu0 %v1530
        %2175 = vmatprep.subr.bf16.mxu0 0
        %2176 = vmatpush1.bf16.msra.mxu0 %v1537
        %2177 = vmatprep.subr.bf16.mxu0 0
        %2178 = vmatpush1.bf16.msra.mxu0 %v1544
        %2179 = vmatprep.subr.bf16.mxu0 0
        %2180 = vmatpush1.bf16.msra.mxu0 %v1551
        %2181 = vmatprep.subr.bf16.mxu0 0
        %2182 = vmatpush1.bf16.msra.mxu0 %v1558
        %2183 = vmatprep.subr.bf16.mxu0 0
        %2184 = vmatpush1.bf16.msra.mxu0 %v1565
        %2185 = vmatprep.subr.bf16.mxu0 0
        %2186 = vmatpush1.bf16.msra.mxu0 %v1572
        %2187 = vmatprep.mubr.bf16.mxu0 %v461
        %2188 = vmatmul.mubr.bf16.gmra.mrb[0].mxu0 %v460
        %v2189 = vpop.f32.mrb[0].mxu0
        %v2190 = vadd.f32 %v749, %v2189
        %v2191 = vpop.f32.mrb[0].mxu0
        %v2192 = vpop.f32.mrb[0].mxu0
        %v2193 = vpop.f32.mrb[0].mxu0
        %2194 = vdwg.mxu0
        %2195 = vmatprep.subr.bf16.mxu0 0
        %2196 = vmatpush1.bf16.msra.mxu0 %v1579
        %2197 = vmatprep.subr.bf16.mxu0 0
        %2198 = vmatpush1.bf16.msra.mxu0 %v1586
        %2199 = vmatprep.subr.bf16.mxu0 0
        %2200 = vmatpush1.bf16.msra.mxu0 %v1593
        %2201 = vmatprep.subr.bf16.mxu0 0
        %2202 = vmatpush1.bf16.msra.mxu0 %v1600
        %2203 = vmatprep.subr.bf16.mxu0 0
        %2204 = vmatpush1.bf16.msra.mxu0 %v1607
        %2205 = vmatprep.subr.bf16.mxu0 0
        %2206 = vmatpush1.bf16.msra.mxu0 %v1614
        %2207 = vmatprep.subr.bf16.mxu0 0
        %2208 = vmatpush1.bf16.msra.mxu0 %v1621
        %2209 = vmatprep.subr.bf16.mxu0 0
        %2210 = vmatpush1.bf16.msra.mxu0 %v1628
        %2211 = vmatprep.subr.bf16.mxu0 0
        %2212 = vmatpush1.bf16.msra.mxu0 %v1635
        %2213 = vmatprep.subr.bf16.mxu0 0
        %2214 = vmatpush1.bf16.msra.mxu0 %v1642
        %2215 = vmatprep.subr.bf16.mxu0 0
        %2216 = vmatpush1.bf16.msra.mxu0 %v1649
        %2217 = vmatprep.subr.bf16.mxu0 0
        %2218 = vmatpush1.bf16.msra.mxu0 %v1656
        %2219 = vmatprep.subr.bf16.mxu0 0
        %2220 = vmatpush1.bf16.msra.mxu0 %v1663
        %2221 = vmatprep.subr.bf16.mxu0 0
        %2222 = vmatpush1.bf16.msra.mxu0 %v1670
        %2223 = vmatprep.subr.bf16.mxu0 0
        %2224 = vmatpush1.bf16.msra.mxu0 %v1677
        %2225 = vmatprep.subr.bf16.mxu0 0
        %2226 = vmatpush1.bf16.msra.mxu0 %v1684
        %2227 = vmatprep.mubr.bf16.mxu0 %v463
        %2228 = vmatmul.mubr.bf16.gmra.mrb[0].mxu0 %v462
        %v2229 = vpop.f32.mrb[0].mxu0
        %v2230 = vadd.f32 %v2190, %v2229
        %v2231 = vpop.f32.mrb[0].mxu0
        %v2232 = vpop.f32.mrb[0].mxu0
        %v2233 = vpop.f32.mrb[0].mxu0
        %2234 = vdwg.mxu0
        %v2235 = vsub.f32 0.0, %v1985
        %v2236 = vsub.f32 0.0, %v1987
        %v2237 = vsub.f32 0.0, %v2067
        %v2238 = vsub.f32 0.0, %v2069
        %v2239 = vsub.f32 0.0, %v2149
        %v2240 = vsub.f32 0.0, %v2151
        %v2241 = vsub.f32 0.0, %v2230
        %v2242 = vmul.f32 %v2235, 1.442695
        %v2243 = vpow.pop %v2242
        %v2244 = vmul.f32 %v2236, 1.442695
        %v2245 = vpow.pop %v2244
        %v2246 = vmul.f32 %v2237, 1.442695
        %v2247 = vpow.pop %v2246
        %v2248 = vmul.f32 %v2238, 1.442695
        %v2249 = vpow.pop %v2248
        %v2250 = vmul.f32 %v2239, 1.442695
        %v2251 = vpow.pop %v2250
        %v2252 = vmul.f32 %v2240, 1.442695
        %v2253 = vpow.pop %v2252
        %v2254 = vmul.f32 %v2241, 1.442695
        %v2255 = vpow.pop %v2254
        %v2256 = vadd.f32 %v2243, 1.0
        %v2257 = vadd.f32 %v2245, 1.0
        %v2258 = vadd.f32 %v2247, 1.0
        %v2259 = vadd.f32 %v2249, 1.0
        %v2260 = vadd.f32 %v2251, 1.0
        %v2261 = vadd.f32 %v2253, 1.0
        %v2262 = vadd.f32 %v2255, 1.0
        %v2263 = vrcp.pop %v2256
        %v2264 = vrcp.pop %v2257
        %v2265 = vrcp.pop %v2258
        %v2266 = vrcp.pop %v2259
        %v2267 = vrcp.pop %v2260
        %v2268 = vrcp.pop %v2261
        %v2269 = vrcp.pop %v2262
        %2270 = vst [vmem:[%s230] sm:$0xff] %v2263
        %2271 = vst [vmem:[%s230 + $0x8] sm:$0xff] %v2264
        %2272 = vst [vmem:[%s230 + $0x10] sm:$0xff] %v2265
        %2273 = vst [vmem:[%s230 + $0x18] sm:$0xff] %v2266
        %2274 = vst [vmem:[%s230 + $0x20] sm:$0xff] %v2267
        %2275 = vst [vmem:[%s230 + $0x28] sm:$0xff] %v2268
        %2276 = vst [vmem:[%s230 + $0x30] sm:$0xff] %v2269
        %s2277 = sand.u32 %s138, 1
        %s2278 = scalar_lea.sflag [#allocation4], %s2277
        %s2279 = sand.u32 %s138, 1
        %s2280 = smul.addr %s2279, 56
        %s2281 = scalar_lea.vmem [#allocation5], %s2280
        // Predicated region
        $region45: #{tpu_custom_call.1} parent=39 // pred_check
          %p2282 = pneg %p148
        $region46: #{tpu_custom_call.1} parent=39 // pred_check_branch
          %2284 = sbr.rel (%p2282) target = $region48
        $region47: #{tpu_custom_call.1} parent=39 // pred_region
          %s2286 = ssub.s32 896, 896
          %2287 = vsyncadd %s2278, %s2286
          %s2288 = smul.addr %s20, 7
          %s2289 = smul.addr %s2288, 128
          %s2290 = scalar_lea.hbm %s5, %s2289
          %s2292 = sshll.u32 %s2281, 4
          %s2293 = int_to_ptr.vmem [resolvable:$true] %s2292
          %2295 = dma.vmem_to_hbm [thread:$0]  %s2293, 896, %s2290, %s2278
        $region48: #{tpu_custom_call.1} parent=39 // pred_fallthru
          _
      $region40: #{tpu_custom_call.1} parent=5 // pred_fallthru
        _
      %p2296 = scmp.le.s32.totalorder 2, %s15
      // Predicated region
      $region49: #{tpu_custom_call.1} parent=5 // pred_check
        %p2297 = pneg %p2296
      $region50: #{tpu_custom_call.1} parent=5 // pred_check_branch
        %2299 = sbr.rel (%p2297) target = $region52
      $region51: #{tpu_custom_call.1} parent=5 // pred_region
        %s2300 = ssub.s32 %s15, 2
        // Predicated region
        $region53: #{tpu_custom_call.1} parent=51 // pred_check
          %p2301 = pneg %p154
        $region54: #{tpu_custom_call.1} parent=51 // pred_check_branch
          %2303 = sbr.rel (%p2301) target = $region56
        $region55: #{tpu_custom_call.1} parent=51 // pred_region
          %s2304 = sand.u32 %s139, 1
          %s2305 = scalar_lea.sflag [#allocation4], %s2304
          %s2306 = sand.u32 %s139, 1
          %s2307 = smul.addr %s2306, 56
          %s2308 = scalar_lea.vmem [#allocation5], %s2307
          %2309 = dma.done %s2305, 896
        $region56: #{tpu_custom_call.1} parent=51 // pred_fallthru
          _
      $region52: #{tpu_custom_call.1} parent=5 // pred_fallthru
        _
    $region6: #{tpu_custom_call.1} parent=1 // loop_footer
      %s19 = sadd.s32 1, %s15
    $region7: #{tpu_custom_call.1} parent=1 // loop_footer_branch
      %14 = sbr.rel target = $region3
    $region8: #{tpu_custom_call.1} parent=1 // loop_exit
      _
    %2310 = vsyncpa [#allocation3], 1
    %s2311 = scalar_lea.sflag [#allocation3], 1
    %2312 = vsyncpa %s2311, 1
    %2313 = vsyncpa [#allocation4], 1
    %s2314 = scalar_lea.sflag [#allocation4], 1
    %2315 = vsyncpa %s2314, 1

</llo_original>
